<compile_context>
chip_gen: v7x
topology: tpu7x:2x2x1
jax: 0.10.0
libtpu: 0.0.40
codegen_flags: <defaults>
</compile_context>

<pallas_src>
import functools

import jax
import jax.numpy as jnp
from jax.experimental import pallas as pl
from jax.experimental.pallas import tpu as pltpu


def _round_up(x, m):
    return ((x + m - 1) // m) * m


def _pick_tile(total, align, cap):
    """Largest multiple of `align` that divides `total` and is <= cap; else `total`."""
    t = min(cap, total)
    t -= t % align
    while t >= align:
        if total % t == 0:
            return t
        t -= align
    return total  # full-extent block (legal even if not 8/128-aligned)


def _fused_conv_kernel(x_ref, w_ref, b_ref, o_ref, *, K, TH, TN):
    """One (batch, row-tile, lane-tile) grid step.

    x_ref: (1, Hp, CPAD)   padded rows of one batch element, (Wp, Cin) flattened
                           and zero-padded to a 128-multiple contraction dim.
    w_ref: (K, CPAD, TN)   width-Toeplitz fused (averaged) weights, one lane tile.
    b_ref: (1, TN)         fused bias tiled over W (lane tile).
    o_ref: (1, TH, TN)     lane-dense output tile (rows h0 .. h0+TH-1).
    """
    h0 = pl.multiple_of(pl.program_id(1) * TH, TH)
    acc = jnp.zeros((TH, TN), jnp.float32)
    # Unrolled over the K row taps only (K = 2*num_kernels - 1, small).  Each
    # tap is one MXU GEMM: (TH, CPAD) @ (CPAD, TN), full 128-lane contraction.
    # TODO(synk): on v5e/v6e, if weight-push/drain dominates, fold the K taps
    # into a single GEMM by staging a (TH, K*CPAD) LHS in VMEM scratch.
    for dy in range(K):
        rows = x_ref[0, pl.ds(h0 + dy, TH), :]        # (TH, CPAD) sublane slice
        acc = acc + jnp.dot(rows, w_ref[dy], preferred_element_type=jnp.float32)
    acc = acc + b_ref[...].astype(jnp.float32)         # (1, TN) broadcasts over rows
    o_ref[0] = acc.astype(o_ref.dtype)


def prepare_inception_params(weights, biases, num_kernels, width,
                             matmul_dtype=jnp.float32):
    """Fold the per-kernel convs into one centered KxK kernel, Toeplitz-expand it
    over width, and average the biases.

    Parameter-only work: call once per model / width, NOT per forward pass.
    Returns (big_w: (K, CPAD, W*Cout), b_flat: (1, W*Cout)).
    """
    Cout, Cin = weights[0].shape[0], weights[0].shape[1]
    p_max = num_kernels - 1
    K = 2 * p_max + 1
    W = width
    Wp = W + 2 * p_max
    WPCIN = Wp * Cin
    CPAD = _round_up(WPCIN, 128)
    WCOUT = W * Cout

    # Fuse: zero-pad each kernel to KxK (centered), average weights and biases.
    w_eff = jnp.zeros((K, K, Cin, Cout), jnp.float32)
    for i, w in enumerate(weights):
        k = 2 * i + 1
        w_hwio = jnp.transpose(w, (2, 3, 1, 0))         # OIHW -> HWIO
        off = p_max - i
        w_eff = w_eff.at[off:off + k, off:off + k, :, :].add(w_hwio)
    w_eff = w_eff / float(num_kernels)
    b_eff = sum(biases) / float(num_kernels)            # (Cout,)

    # Toeplitz-expand along width:
    #   big_w[dy, wp*Cin + c, w*Cout + o] = w_eff[dy, wp - w, c, o]  (0 elsewhere)
    shift = (jnp.arange(Wp)[None, :, None]
             == (jnp.arange(W)[None, None, :] + jnp.arange(K)[:, None, None])
             ).astype(jnp.float32)                      # (K=dx, Wp, W)
    big_w = jnp.einsum("xpw,yxco->ypcwo", shift, w_eff)  # (K, Wp, Cin, W, Cout)
    big_w = big_w.reshape(K, WPCIN, WCOUT)
    if CPAD > WPCIN:
        big_w = jnp.pad(big_w, ((0, 0), (0, CPAD - WPCIN), (0, 0)))
    big_w = big_w.astype(matmul_dtype)
    b_flat = jnp.tile(b_eff, (W,)).reshape(1, WCOUT).astype(jnp.float32)
    return big_w, b_flat


def inception_block_v1_forward(x_nchw, big_w, b_flat, num_kernels,
                               matmul_dtype=jnp.float32):
    """Equivalent of Inception_Block_V1.forward. x_nchw: (N, Cin, H, W)."""
    N, Cin, H, W = x_nchw.shape
    p_max = num_kernels - 1
    K = 2 * p_max + 1
    Hp, Wp = H + 2 * p_max, W + 2 * p_max
    WPCIN = Wp * Cin
    CPAD = big_w.shape[1]
    WCOUT = big_w.shape[2]
    Cout = WCOUT // W

    # NCHW -> NHWC, pad spatially with max padding, flatten (Wp, Cin), and
    # zero-pad the contraction dim to CPAD (math-free zeros, lane-dense loads).
    # TODO(synk): in a real model keep activations NHWC end-to-end so this
    # transpose/pad does not round-trip HBM on every call.
    x = jnp.transpose(x_nchw, (0, 2, 3, 1))
    x_pad = jnp.pad(x, ((0, 0), (p_max, p_max), (p_max, p_max), (0, 0)))
    x2d = x_pad.reshape(N, Hp, WPCIN)
    if CPAD > WPCIN:
        x2d = jnp.pad(x2d, ((0, 0), (0, 0), (0, CPAD - WPCIN)))
    x2d = x2d.astype(matmul_dtype)

    # Tile selection: large M (output rows) to fill the MXU, 128-multiple lane
    # tile over W*Cout.  Batch axis N keeps >= 2 parallel steps for v7x.
    TH = _pick_tile(H, 8, 256)
    TN = _pick_tile(WCOUT, 128, 512)

    # Explicit VMEM budget (double-buffered blocks + f32 accumulator), with
    # headroom under v7x's 64 MiB physical VMEM.
    dsize = jnp.dtype(matmul_dtype).itemsize
    est_vmem = (2 * Hp * CPAD * dsize          # x rows (double-buffered)
                + 2 * K * CPAD * TN * dsize    # weight lane tile
                + 2 * TN * 4                   # bias
                + 2 * TH * TN * 4              # output tile
                + TH * TN * 4)                 # f32 accumulator
    vmem_limit = int(min(max(2 * est_vmem, 16 * 1024 * 1024), 48 * 1024 * 1024))

    kernel = functools.partial(_fused_conv_kernel, K=K, TH=TH, TN=TN)
    out_flat = pl.pallas_call(
        kernel,
        out_shape=jax.ShapeDtypeStruct((N, H, WCOUT), x_nchw.dtype),
        grid=(N, H // TH, WCOUT // TN),
        in_specs=[
            # Full padded rows of one batch element; index constant over the
            # inner grid axes -> stays VMEM-resident, no re-DMA per tile.
            pl.BlockSpec((1, Hp, CPAD), lambda n, h, j: (n, 0, 0)),
            # Weight / bias lane tiles; constant over n and h.
            pl.BlockSpec((K, CPAD, TN), lambda n, h, j: (0, 0, j)),
            pl.BlockSpec((1, TN), lambda n, h, j: (0, j)),
        ],
        out_specs=pl.BlockSpec((1, TH, TN), lambda n, h, j: (n, h, j)),
        compiler_params=pltpu.CompilerParams(
            dimension_semantics=("parallel", "parallel", "parallel"),
            vmem_limit_bytes=vmem_limit,
        ),
    )(x2d, big_w, b_flat)

    # Lane-dense kernel output -> NCHW with XLA (cheap relative to the conv).
    out_nhwc = out_flat.reshape(N, H, W, Cout)
    return jnp.transpose(out_nhwc, (0, 3, 1, 2))


def init_params(key, in_channels, out_channels, num_kernels):
    """Deterministic kaiming_normal_(mode='fan_out', relu) init, zero biases."""
    weights, biases = [], []
    for i in range(num_kernels):
        k = 2 * i + 1
        key, sub = jax.random.split(key)
        fan_out = out_channels * k * k
        std = (2.0 / fan_out) ** 0.5
        w = std * jax.random.normal(
            sub, (out_channels, in_channels, k, k), jnp.float32
        )
        weights.append(w)
        biases.append(jnp.zeros((out_channels,), jnp.float32))
    return weights, biases


def reference_forward(x_nchw, weights, biases, num_kernels):
    """Pure-JAX reference (per-kernel conv, stack, mean) mirroring PyTorch."""
    x = jnp.transpose(x_nchw, (0, 2, 3, 1))
    outs = []
    for i in range(num_kernels):
        w_hwio = jnp.transpose(weights[i], (2, 3, 1, 0))
        o = jax.lax.conv_general_dilated(
            x, w_hwio, window_strides=(1, 1), padding="SAME",
            dimension_numbers=("NHWC", "HWIO", "NHWC"),
        ) + biases[i]
        outs.append(o)
    res = jnp.stack(outs, axis=-1).mean(-1)
    return jnp.transpose(res, (0, 3, 1, 2))


if __name__ == "__main__":
    N, Cin, Cout, H, W = 2, 4, 8, 16, 16
    num_kernels = 6

    key = jax.random.PRNGKey(0)
    key, xk = jax.random.split(key)
    x = jax.random.normal(xk, (N, Cin, H, W), jnp.float32)
    weights, biases = init_params(key, Cin, Cout, num_kernels)

    # Weight fusion is parameter-only work: done once, outside the forward path.
    big_w, b_flat = prepare_inception_params(weights, biases, num_kernels, W)

    out = inception_block_v1_forward(x, big_w, b_flat, num_kernels)
    out = jax.block_until_ready(out)

    ref = reference_forward(x, weights, biases, num_kernels)
    assert out.shape == (N, Cout, H, W), out.shape
    max_err = float(jnp.max(jnp.abs(out - ref)))
    assert jnp.allclose(out, ref, atol=1e-4, rtol=1e-4), max_err

    print("KERNEL_OK")
</pallas_src>

<mosaic_0001>
module attributes {stable_mosaic.version = 11 : i64} {
  func.func @_fused_conv_kernel(%arg0: i32, %arg1: i32, %arg2: i32, %arg3: memref<1x26x128xf32, #tpu.memory_space<vmem>>, %arg4: memref<11x128x128xf32, #tpu.memory_space<vmem>>, %arg5: memref<1x128xf32, #tpu.memory_space<vmem>>, %arg6: memref<1x16x128xf32, #tpu.memory_space<vmem>>) attributes {dimension_semantics = [#tpu.dimension_semantics<parallel>, #tpu.dimension_semantics<parallel>, #tpu.dimension_semantics<parallel>], iteration_bounds = array<i64: 2, 1, 1>, scalar_prefetch = 0 : i64, scratch_operands = 0 : i64, tpu.core_type = #tpu.core_type<tc>, window_params = [{transform_indices = @transform_0, window_bounds = array<i64: 1, 26, 128>}, {transform_indices = @transform_1, window_bounds = array<i64: 11, 128, 128>}, {transform_indices = @transform_2, window_bounds = array<i64: 1, 128>}, {transform_indices = @transform_3, window_bounds = array<i64: 1, 16, 128>}]} {
    %c16_i32 = arith.constant 16 : i32
    %0 = arith.muli %arg1, %c16_i32 : i32
    %1 = tpu.assume_multiple %0, 16 : i32
    %cst = arith.constant 0.000000e+00 : f32
    %2 = vector.broadcast %cst : f32 to vector<16x128xf32>
    %c0_i32 = arith.constant 0 : i32
    %3 = arith.addi %1, %c0_i32 : i32
    %c0 = arith.constant 0 : index
    %4 = arith.index_cast %3 : i32 to index
    %c0_0 = arith.constant 0 : index
    %5 = vector.load %arg3[%c0, %4, %c0_0] : memref<1x26x128xf32, #tpu.memory_space<vmem>>, vector<1x16x128xf32>
    %6 = vector.shape_cast %5 : vector<1x16x128xf32> to vector<16x128xf32>
    %c0_1 = arith.constant 0 : index
    %c0_2 = arith.constant 0 : index
    %c0_3 = arith.constant 0 : index
    %7 = vector.load %arg4[%c0_1, %c0_2, %c0_3] : memref<11x128x128xf32, #tpu.memory_space<vmem>>, vector<1x128x128xf32>
    %8 = vector.shape_cast %7 : vector<1x128x128xf32> to vector<128x128xf32>
    %cst_4 = arith.constant dense<0.000000e+00> : vector<16x128xf32>
    %9 = tpu.matmul %6, %8, %cst_4 {dimension_numbers = #tpu.dot_dimension_numbers<[1], [0], [0], [1], [0, 0, 1, 1], [], []>} : vector<16x128xf32>, vector<128x128xf32>, vector<16x128xf32> -> vector<16x128xf32>
    %10 = arith.addf %2, %9 : vector<16x128xf32>
    %c1_i32 = arith.constant 1 : i32
    %11 = arith.addi %1, %c1_i32 : i32
    %c0_5 = arith.constant 0 : index
    %12 = arith.index_cast %11 : i32 to index
    %c0_6 = arith.constant 0 : index
    %13 = vector.load %arg3[%c0_5, %12, %c0_6] : memref<1x26x128xf32, #tpu.memory_space<vmem>>, vector<1x16x128xf32>
    %14 = vector.shape_cast %13 : vector<1x16x128xf32> to vector<16x128xf32>
    %c1 = arith.constant 1 : index
    %c0_7 = arith.constant 0 : index
    %c0_8 = arith.constant 0 : index
    %15 = vector.load %arg4[%c1, %c0_7, %c0_8] : memref<11x128x128xf32, #tpu.memory_space<vmem>>, vector<1x128x128xf32>
    %16 = vector.shape_cast %15 : vector<1x128x128xf32> to vector<128x128xf32>
    %cst_9 = arith.constant dense<0.000000e+00> : vector<16x128xf32>
    %17 = tpu.matmul %14, %16, %cst_9 {dimension_numbers = #tpu.dot_dimension_numbers<[1], [0], [0], [1], [0, 0, 1, 1], [], []>} : vector<16x128xf32>, vector<128x128xf32>, vector<16x128xf32> -> vector<16x128xf32>
    %18 = arith.addf %10, %17 : vector<16x128xf32>
    %c2_i32 = arith.constant 2 : i32
    %19 = arith.addi %1, %c2_i32 : i32
    %c0_10 = arith.constant 0 : index
    %20 = arith.index_cast %19 : i32 to index
    %c0_11 = arith.constant 0 : index
    %21 = vector.load %arg3[%c0_10, %20, %c0_11] : memref<1x26x128xf32, #tpu.memory_space<vmem>>, vector<1x16x128xf32>
    %22 = vector.shape_cast %21 : vector<1x16x128xf32> to vector<16x128xf32>
    %c2 = arith.constant 2 : index
    %c0_12 = arith.constant 0 : index
    %c0_13 = arith.constant 0 : index
    %23 = vector.load %arg4[%c2, %c0_12, %c0_13] : memref<11x128x128xf32, #tpu.memory_space<vmem>>, vector<1x128x128xf32>
    %24 = vector.shape_cast %23 : vector<1x128x128xf32> to vector<128x128xf32>
    %cst_14 = arith.constant dense<0.000000e+00> : vector<16x128xf32>
    %25 = tpu.matmul %22, %24, %cst_14 {dimension_numbers = #tpu.dot_dimension_numbers<[1], [0], [0], [1], [0, 0, 1, 1], [], []>} : vector<16x128xf32>, vector<128x128xf32>, vector<16x128xf32> -> vector<16x128xf32>
    %26 = arith.addf %18, %25 : vector<16x128xf32>
    %c3_i32 = arith.constant 3 : i32
    %27 = arith.addi %1, %c3_i32 : i32
    %c0_15 = arith.constant 0 : index
    %28 = arith.index_cast %27 : i32 to index
    %c0_16 = arith.constant 0 : index
    %29 = vector.load %arg3[%c0_15, %28, %c0_16] : memref<1x26x128xf32, #tpu.memory_space<vmem>>, vector<1x16x128xf32>
    %30 = vector.shape_cast %29 : vector<1x16x128xf32> to vector<16x128xf32>
    %c3 = arith.constant 3 : index
    %c0_17 = arith.constant 0 : index
    %c0_18 = arith.constant 0 : index
    %31 = vector.load %arg4[%c3, %c0_17, %c0_18] : memref<11x128x128xf32, #tpu.memory_space<vmem>>, vector<1x128x128xf32>
    %32 = vector.shape_cast %31 : vector<1x128x128xf32> to vector<128x128xf32>
    %cst_19 = arith.constant dense<0.000000e+00> : vector<16x128xf32>
    %33 = tpu.matmul %30, %32, %cst_19 {dimension_numbers = #tpu.dot_dimension_numbers<[1], [0], [0], [1], [0, 0, 1, 1], [], []>} : vector<16x128xf32>, vector<128x128xf32>, vector<16x128xf32> -> vector<16x128xf32>
    %34 = arith.addf %26, %33 : vector<16x128xf32>
    %c4_i32 = arith.constant 4 : i32
    %35 = arith.addi %1, %c4_i32 : i32
    %c0_20 = arith.constant 0 : index
    %36 = arith.index_cast %35 : i32 to index
    %c0_21 = arith.constant 0 : index
    %37 = vector.load %arg3[%c0_20, %36, %c0_21] : memref<1x26x128xf32, #tpu.memory_space<vmem>>, vector<1x16x128xf32>
    %38 = vector.shape_cast %37 : vector<1x16x128xf32> to vector<16x128xf32>
    %c4 = arith.constant 4 : index
    %c0_22 = arith.constant 0 : index
    %c0_23 = arith.constant 0 : index
    %39 = vector.load %arg4[%c4, %c0_22, %c0_23] : memref<11x128x128xf32, #tpu.memory_space<vmem>>, vector<1x128x128xf32>
    %40 = vector.shape_cast %39 : vector<1x128x128xf32> to vector<128x128xf32>
    %cst_24 = arith.constant dense<0.000000e+00> : vector<16x128xf32>
    %41 = tpu.matmul %38, %40, %cst_24 {dimension_numbers = #tpu.dot_dimension_numbers<[1], [0], [0], [1], [0, 0, 1, 1], [], []>} : vector<16x128xf32>, vector<128x128xf32>, vector<16x128xf32> -> vector<16x128xf32>
    %42 = arith.addf %34, %41 : vector<16x128xf32>
    %c5_i32 = arith.constant 5 : i32
    %43 = arith.addi %1, %c5_i32 : i32
    %c0_25 = arith.constant 0 : index
    %44 = arith.index_cast %43 : i32 to index
    %c0_26 = arith.constant 0 : index
    %45 = vector.load %arg3[%c0_25, %44, %c0_26] : memref<1x26x128xf32, #tpu.memory_space<vmem>>, vector<1x16x128xf32>
    %46 = vector.shape_cast %45 : vector<1x16x128xf32> to vector<16x128xf32>
    %c5 = arith.constant 5 : index
    %c0_27 = arith.constant 0 : index
    %c0_28 = arith.constant 0 : index
    %47 = vector.load %arg4[%c5, %c0_27, %c0_28] : memref<11x128x128xf32, #tpu.memory_space<vmem>>, vector<1x128x128xf32>
    %48 = vector.shape_cast %47 : vector<1x128x128xf32> to vector<128x128xf32>
    %cst_29 = arith.constant dense<0.000000e+00> : vector<16x128xf32>
    %49 = tpu.matmul %46, %48, %cst_29 {dimension_numbers = #tpu.dot_dimension_numbers<[1], [0], [0], [1], [0, 0, 1, 1], [], []>} : vector<16x128xf32>, vector<128x128xf32>, vector<16x128xf32> -> vector<16x128xf32>
    %50 = arith.addf %42, %49 : vector<16x128xf32>
    %c6_i32 = arith.constant 6 : i32
    %51 = arith.addi %1, %c6_i32 : i32
    %c0_30 = arith.constant 0 : index
    %52 = arith.index_cast %51 : i32 to index
    %c0_31 = arith.constant 0 : index
    %53 = vector.load %arg3[%c0_30, %52, %c0_31] : memref<1x26x128xf32, #tpu.memory_space<vmem>>, vector<1x16x128xf32>
    %54 = vector.shape_cast %53 : vector<1x16x128xf32> to vector<16x128xf32>
    %c6 = arith.constant 6 : index
    %c0_32 = arith.constant 0 : index
    %c0_33 = arith.constant 0 : index
    %55 = vector.load %arg4[%c6, %c0_32, %c0_33] : memref<11x128x128xf32, #tpu.memory_space<vmem>>, vector<1x128x128xf32>
    %56 = vector.shape_cast %55 : vector<1x128x128xf32> to vector<128x128xf32>
    %cst_34 = arith.constant dense<0.000000e+00> : vector<16x128xf32>
    %57 = tpu.matmul %54, %56, %cst_34 {dimension_numbers = #tpu.dot_dimension_numbers<[1], [0], [0], [1], [0, 0, 1, 1], [], []>} : vector<16x128xf32>, vector<128x128xf32>, vector<16x128xf32> -> vector<16x128xf32>
    %58 = arith.addf %50, %57 : vector<16x128xf32>
    %c7_i32 = arith.constant 7 : i32
    %59 = arith.addi %1, %c7_i32 : i32
    %c0_35 = arith.constant 0 : index
    %60 = arith.index_cast %59 : i32 to index
    %c0_36 = arith.constant 0 : index
    %61 = vector.load %arg3[%c0_35, %60, %c0_36] : memref<1x26x128xf32, #tpu.memory_space<vmem>>, vector<1x16x128xf32>
    %62 = vector.shape_cast %61 : vector<1x16x128xf32> to vector<16x128xf32>
    %c7 = arith.constant 7 : index
    %c0_37 = arith.constant 0 : index
    %c0_38 = arith.constant 0 : index
    %63 = vector.load %arg4[%c7, %c0_37, %c0_38] : memref<11x128x128xf32, #tpu.memory_space<vmem>>, vector<1x128x128xf32>
    %64 = vector.shape_cast %63 : vector<1x128x128xf32> to vector<128x128xf32>
    %cst_39 = arith.constant dense<0.000000e+00> : vector<16x128xf32>
    %65 = tpu.matmul %62, %64, %cst_39 {dimension_numbers = #tpu.dot_dimension_numbers<[1], [0], [0], [1], [0, 0, 1, 1], [], []>} : vector<16x128xf32>, vector<128x128xf32>, vector<16x128xf32> -> vector<16x128xf32>
    %66 = arith.addf %58, %65 : vector<16x128xf32>
    %c8_i32 = arith.constant 8 : i32
    %67 = arith.addi %1, %c8_i32 : i32
    %c0_40 = arith.constant 0 : index
    %68 = arith.index_cast %67 : i32 to index
    %c0_41 = arith.constant 0 : index
    %69 = vector.load %arg3[%c0_40, %68, %c0_41] : memref<1x26x128xf32, #tpu.memory_space<vmem>>, vector<1x16x128xf32>
    %70 = vector.shape_cast %69 : vector<1x16x128xf32> to vector<16x128xf32>
    %c8 = arith.constant 8 : index
    %c0_42 = arith.constant 0 : index
    %c0_43 = arith.constant 0 : index
    %71 = vector.load %arg4[%c8, %c0_42, %c0_43] : memref<11x128x128xf32, #tpu.memory_space<vmem>>, vector<1x128x128xf32>
    %72 = vector.shape_cast %71 : vector<1x128x128xf32> to vector<128x128xf32>
    %cst_44 = arith.constant dense<0.000000e+00> : vector<16x128xf32>
    %73 = tpu.matmul %70, %72, %cst_44 {dimension_numbers = #tpu.dot_dimension_numbers<[1], [0], [0], [1], [0, 0, 1, 1], [], []>} : vector<16x128xf32>, vector<128x128xf32>, vector<16x128xf32> -> vector<16x128xf32>
    %74 = arith.addf %66, %73 : vector<16x128xf32>
    %c9_i32 = arith.constant 9 : i32
    %75 = arith.addi %1, %c9_i32 : i32
    %c0_45 = arith.constant 0 : index
    %76 = arith.index_cast %75 : i32 to index
    %c0_46 = arith.constant 0 : index
    %77 = vector.load %arg3[%c0_45, %76, %c0_46] : memref<1x26x128xf32, #tpu.memory_space<vmem>>, vector<1x16x128xf32>
    %78 = vector.shape_cast %77 : vector<1x16x128xf32> to vector<16x128xf32>
    %c9 = arith.constant 9 : index
    %c0_47 = arith.constant 0 : index
    %c0_48 = arith.constant 0 : index
    %79 = vector.load %arg4[%c9, %c0_47, %c0_48] : memref<11x128x128xf32, #tpu.memory_space<vmem>>, vector<1x128x128xf32>
    %80 = vector.shape_cast %79 : vector<1x128x128xf32> to vector<128x128xf32>
    %cst_49 = arith.constant dense<0.000000e+00> : vector<16x128xf32>
    %81 = tpu.matmul %78, %80, %cst_49 {dimension_numbers = #tpu.dot_dimension_numbers<[1], [0], [0], [1], [0, 0, 1, 1], [], []>} : vector<16x128xf32>, vector<128x128xf32>, vector<16x128xf32> -> vector<16x128xf32>
    %82 = arith.addf %74, %81 : vector<16x128xf32>
    %c10_i32 = arith.constant 10 : i32
    %83 = arith.addi %1, %c10_i32 : i32
    %c0_50 = arith.constant 0 : index
    %84 = arith.index_cast %83 : i32 to index
    %c0_51 = arith.constant 0 : index
    %85 = vector.load %arg3[%c0_50, %84, %c0_51] : memref<1x26x128xf32, #tpu.memory_space<vmem>>, vector<1x16x128xf32>
    %86 = vector.shape_cast %85 : vector<1x16x128xf32> to vector<16x128xf32>
    %c10 = arith.constant 10 : index
    %c0_52 = arith.constant 0 : index
    %c0_53 = arith.constant 0 : index
    %87 = vector.load %arg4[%c10, %c0_52, %c0_53] : memref<11x128x128xf32, #tpu.memory_space<vmem>>, vector<1x128x128xf32>
    %88 = vector.shape_cast %87 : vector<1x128x128xf32> to vector<128x128xf32>
    %cst_54 = arith.constant dense<0.000000e+00> : vector<16x128xf32>
    %89 = tpu.matmul %86, %88, %cst_54 {dimension_numbers = #tpu.dot_dimension_numbers<[1], [0], [0], [1], [0, 0, 1, 1], [], []>} : vector<16x128xf32>, vector<128x128xf32>, vector<16x128xf32> -> vector<16x128xf32>
    %90 = arith.addf %82, %89 : vector<16x128xf32>
    %c0_55 = arith.constant 0 : index
    %c0_56 = arith.constant 0 : index
    %91 = vector.load %arg5[%c0_55, %c0_56] : memref<1x128xf32, #tpu.memory_space<vmem>>, vector<1x128xf32>
    %92 = vector.broadcast %91 : vector<1x128xf32> to vector<16x128xf32>
    %93 = arith.addf %90, %92 : vector<16x128xf32>
    %c0_57 = arith.constant 0 : index
    %c0_58 = arith.constant 0 : index
    %c0_59 = arith.constant 0 : index
    %94 = vector.load %arg6[%c0_57, %c0_58, %c0_59] : memref<1x16x128xf32, #tpu.memory_space<vmem>>, vector<1x16x128xf32>
    %95 = vector.shape_cast %94 : vector<1x16x128xf32> to vector<16x128xf32>
    %96 = vector.shape_cast %93 : vector<16x128xf32> to vector<1x16x128xf32>
    tpu.vector_store %arg6[%c0_57, %c0_58, %c0_59], %96 {strides = array<i32>} : memref<1x16x128xf32, #tpu.memory_space<vmem>>, vector<1x16x128xf32>,
    return
  }
  func.func @transform_0(%arg0: i32, %arg1: i32, %arg2: i32) -> (i32, i32, i32) {
    %c0_i32 = arith.constant 0 : i32
    %c0_i32_0 = arith.constant 0 : i32
    %c0_i32_1 = arith.constant 0 : i32
    return %arg0, %c0_i32, %c0_i32_0 : i32, i32, i32
  }
  func.func @transform_1(%arg0: i32, %arg1: i32, %arg2: i32) -> (i32, i32, i32) {
    %c0_i32 = arith.constant 0 : i32
    %c0_i32_0 = arith.constant 0 : i32
    %c0_i32_1 = arith.constant 0 : i32
    return %c0_i32, %c0_i32_0, %arg2 : i32, i32, i32
  }
  func.func @transform_2(%arg0: i32, %arg1: i32, %arg2: i32) -> (i32, i32) {
    %c0_i32 = arith.constant 0 : i32
    %c0_i32_0 = arith.constant 0 : i32
    return %c0_i32, %arg2 : i32, i32
  }
  func.func @transform_3(%arg0: i32, %arg1: i32, %arg2: i32) -> (i32, i32, i32) {
    %c0_i32 = arith.constant 0 : i32
    return %arg0, %arg1, %arg2 : i32, i32, i32
  }
}

</mosaic_0001>

<llo_original>
// kernel: tpu_custom_call.1
$region0: #{tpu_custom_call.1}
  #allocation0 [shape = 'u32[]', space=smem, size = 0x4, offset = 0x4, fixed_abs, tag = 'smem constant byte address 0x4 - core index']
  #allocation1 [shape = 'u32[144,128]{1,0:T(1,128)}', space=vmem, size = 0x12000, scoped, tag = 'internal scratch']
  %s0 = inlined_call_operand.vmem [shape: f32[2,26,128], index: 0, kind: input, shape index: {}]
  %s1 = inlined_call_operand.hbm [shape: f32[11,128,128], index: 1, kind: input, shape index: {}]
  %s2 = inlined_call_operand.vmem [shape: f32[1,128], index: 2, kind: input, shape index: {}]
  %s3 = inlined_call_operand.hbm [shape: f32[2,16,128], index: 3, kind: output, shape index: {}]
  %s4 = sld [smem:[#allocation0]]
  $region49: #{tpu_custom_call.1} parent=0
    _
  %s6 = ssub.s32 1, %s4
  %s7 = scalar_select 0, %s6, %s4
  $region1: #{tpu_custom_call.1} parent=0
    #allocation2 [shape = 'u8[720896]{0}', space=vmem, size = 0xb0000, scoped, tag = 'input window, operand 1, single buffered']
    #allocation3 [shape = 's32[2]{0}', space=sflag, size = 0x8, scoped, tag = 'scoped memory for tpu_custom_call.1']
    #allocation4 [shape = 's32[2]{0}', space=sflag, size = 0x8, scoped, tag = 'scoped memory for tpu_custom_call.1']
    #allocation5 [shape = 'u8[16384]{0}', space=vmem, size = 0x4000, scoped, tag = 'output window, operand 0']
    %8 = vsyncpa [#allocation3], 0
    %9 = vsyncpa [#allocation4], 0
    %s10 = scalar_lea.sflag [#allocation4], 1
    %11 = vsyncpa %s10, 0
    loop: start=0, step=1, limit=4
    $region2: #{tpu_custom_call.1} parent=1 // loop_pre_header
      _
    $region3: #{tpu_custom_call.1} parent=1 // loop_header
      %s13 = sphi 0, %s17
      %p14 = scmp.ge.s32.totalorder %s13, 4
      %s20 = sphi 0, %s39
      %s21 = sphi 0, %s35
      %s22 = sphi 0, %s31
      %s23 = sphi 0, %s20
      %s24 = sphi 0, %s21
      %s25 = sphi 0, %s22
      %s26 = sphi 0, %s23
      %s27 = sphi 0, %s24
      %s28 = sphi 0, %s25
      %s42 = sphi 0, %s44
      %s45 = sphi 0, %s42
      %s46 = sphi 0, %s45
      %s62 = sphi 0, %s46
      %s68 = sphi 0, %s70
      %s71 = sphi 0, %s68
      %s72 = sphi 0, %s71
      %s88 = sphi 0, %s72
      %s94 = sphi 0, %s96
      %s97 = sphi 0, %s94
      %s98 = sphi 0, %s97
      %s114 = sphi 0, %s98
      %s124 = sphi 0, %s126
      %s127 = sphi 0, %s124
      %s128 = sphi 0, %s127
      %s144 = sphi 0, %s128
    $region4: #{tpu_custom_call.1} parent=1 // loop_header_branch
      %16 = sbr.rel (%p14) target = $region8
    $region5: #{tpu_custom_call.1} parent=1 // loop_body
      %s18 = ssub.s32 %s13, 1
      %s19 = ssub.s32 %s13, 2
      %s29 = sadd.s32 1, %s22
      %p30 = scmp.ge.s32.totalorder %s29, 1
      %s31 = scalar_select %p30, 0, %s29
      %s32 = sadd.s32 1, %s21
      %s33 = scalar_select %p30, %s32, %s21
      %p34 = scmp.ge.s32.totalorder %s33, 1
      %s35 = scalar_select %p34, 0, %s33
      %s36 = sadd.s32 1, %s20
      %s37 = scalar_select %p34, %s36, %s20
      %p38 = scmp.ge.s32.totalorder %s37, 2
      %s39 = scalar_select %p38, 0, %s37
      %s40 = ssub.s32 %s20, %s39
      %p41 = scmp.eq.s32.totalorder %s40, 0
      %s43 = sadd.s32 %s42, 1
      %s44 = scalar_select %p41, %s42, %s43
      %p47 = pneg %p41
      %p48 = scmp.eq.s32.totalorder %s13, 1
      %p49 = por %p47, %p48
      %p50 = scmp.ne.s32.totalorder %s42, %s45
      %p51 = scmp.eq.s32.totalorder %s13, 0
      %p52 = por %p50, %p51
      %p53 = scmp.ne.s32.totalorder %s42, %s45
      %p54 = scmp.eq.s32.totalorder %s18, 1
      %p55 = por %p53, %p54
      %p56 = scmp.ne.s32.totalorder %s45, %s46
      %p57 = scmp.eq.s32.totalorder %s18, 0
      %p58 = por %p56, %p57
      %p59 = scmp.ne.s32.totalorder %s45, %s46
      %p60 = scmp.eq.s32.totalorder %s19, 1
      %p61 = por %p59, %p60
      %p63 = scmp.ne.s32.totalorder %s46, %s62
      %p64 = scmp.eq.s32.totalorder %s19, 0
      %p65 = por %p63, %p64
      %s66 = ssub.s32 %s22, %s31
      %p67 = scmp.eq.s32.totalorder %s66, 0
      %s69 = sadd.s32 %s68, 1
      %s70 = scalar_select %p67, %s68, %s69
      %p73 = pneg %p67
      %p74 = scmp.eq.s32.totalorder %s13, 1
      %p75 = por %p73, %p74
      %p76 = scmp.ne.s32.totalorder %s68, %s71
      %p77 = scmp.eq.s32.totalorder %s13, 0
      %p78 = por %p76, %p77
      %p79 = scmp.ne.s32.totalorder %s68, %s71
      %p80 = scmp.eq.s32.totalorder %s18, 1
      %p81 = por %p79, %p80
      %p82 = scmp.ne.s32.totalorder %s71, %s72
      %p83 = scmp.eq.s32.totalorder %s18, 0
      %p84 = por %p82, %p83
      %p85 = scmp.ne.s32.totalorder %s71, %s72
      %p86 = scmp.eq.s32.totalorder %s19, 1
      %p87 = por %p85, %p86
      %p89 = scmp.ne.s32.totalorder %s72, %s88
      %p90 = scmp.eq.s32.totalorder %s19, 0
      %p91 = por %p89, %p90
      %s92 = ssub.s32 %s22, %s31
      %p93 = scmp.eq.s32.totalorder %s92, 0
      %s95 = sadd.s32 %s94, 1
      %s96 = scalar_select %p93, %s94, %s95
      %p99 = pneg %p93
      %p100 = scmp.eq.s32.totalorder %s13, 1
      %p101 = por %p99, %p100
      %p102 = scmp.ne.s32.totalorder %s94, %s97
      %p103 = scmp.eq.s32.totalorder %s13, 0
      %p104 = por %p102, %p103
      %p105 = scmp.ne.s32.totalorder %s94, %s97
      %p106 = scmp.eq.s32.totalorder %s18, 1
      %p107 = por %p105, %p106
      %p108 = scmp.ne.s32.totalorder %s97, %s98
      %p109 = scmp.eq.s32.totalorder %s18, 0
      %p110 = por %p108, %p109
      %p111 = scmp.ne.s32.totalorder %s97, %s98
      %p112 = scmp.eq.s32.totalorder %s19, 1
      %p113 = por %p111, %p112
      %p115 = scmp.ne.s32.totalorder %s98, %s114
      %p116 = scmp.eq.s32.totalorder %s19, 0
      %p117 = por %p115, %p116
      %s118 = ssub.s32 %s20, %s39
      %s119 = ssub.s32 %s21, %s35
      %s120 = sor.u32 %s118, %s119
      %s121 = ssub.s32 %s22, %s31
      %s122 = sor.u32 %s120, %s121
      %p123 = scmp.eq.s32.totalorder %s122, 0
      %s125 = sadd.s32 %s124, 1
      %s126 = scalar_select %p123, %s124, %s125
      %p129 = pneg %p123
      %p130 = scmp.eq.s32.totalorder %s13, 1
      %p131 = por %p129, %p130
      %p132 = scmp.ne.s32.totalorder %s124, %s127
      %p133 = scmp.eq.s32.totalorder %s13, 0
      %p134 = por %p132, %p133
      %p135 = scmp.ne.s32.totalorder %s124, %s127
      %p136 = scmp.eq.s32.totalorder %s18, 1
      %p137 = por %p135, %p136
      %p138 = scmp.ne.s32.totalorder %s127, %s128
      %p139 = scmp.eq.s32.totalorder %s18, 0
      %p140 = por %p138, %p139
      %p141 = scmp.ne.s32.totalorder %s127, %s128
      %p142 = scmp.eq.s32.totalorder %s19, 1
      %p143 = por %p141, %p142
      %p145 = scmp.ne.s32.totalorder %s128, %s144
      %p146 = scmp.eq.s32.totalorder %s19, 0
      %p147 = por %p145, %p146
      %p148 = scmp.le.s32.totalorder 1, %s13
      %p149 = scmp.lt.s32.totalorder %s13, 3
      %p150 = pnand %p148, %p149
      %p151 = pneg %p150
      // Predicated region
      $region9: #{tpu_custom_call.1} parent=5 // pred_check
        _
      $region10: #{tpu_custom_call.1} parent=5 // pred_check_branch
        %153 = sbr.rel (%p150) target = $region12
      $region11: #{tpu_custom_call.1} parent=5 // pred_region
        %s154 = ssub.s32 %s13, 1
        // Predicated region
        $region13: #{tpu_custom_call.1} parent=11 // pred_check
          %p155 = pneg %p84
        $region14: #{tpu_custom_call.1} parent=11 // pred_check_branch
          %157 = sbr.rel (%p155) target = $region16
        $region15: #{tpu_custom_call.1} parent=11 // pred_region
          %s159 = ssub.s32 22528, 22528
          %160 = vsyncadd [#allocation3], %s159
          %s161 = smul.addr %s25, 128
          %s162 = scalar_lea.hbm %s1, %s161
          %s163 = sshll.u32 [#allocation2], 4
          %s164 = int_to_ptr.vmem [resolvable:$true] %s163
          %169 = dma.hbm_to_vmem [thread:$0]  %s162, 22528, %s164, [#allocation3], 128, 128, 8
        $region16: #{tpu_custom_call.1} parent=11 // pred_fallthru
          _
        // Predicated region
        $region17: #{tpu_custom_call.1} parent=11 // pred_check
          %p170 = pneg %p110
        $region18: #{tpu_custom_call.1} parent=11 // pred_check_branch
          %172 = sbr.rel (%p170) target = $region20
        $region19: #{tpu_custom_call.1} parent=11 // pred_region
          %p173 = scmp.lt.s32.totalorder %s25, 0
          %s174 = scalar_select %p173, %s25, 0
          %s175 = scalar_lea.vmem %s2, %s174
        $region20: #{tpu_custom_call.1} parent=11 // pred_fallthru
          _
      $region12: #{tpu_custom_call.1} parent=5 // pred_fallthru
        _
      %p176 = scmp.lt.s32.totalorder %s13, 2
      // Predicated region
      $region21: #{tpu_custom_call.1} parent=5 // pred_check
        %p177 = pneg %p176
      $region22: #{tpu_custom_call.1} parent=5 // pred_check_branch
        %179 = sbr.rel (%p177) target = $region24
      $region23: #{tpu_custom_call.1} parent=5 // pred_region
        // Predicated region
        $region25: #{tpu_custom_call.1} parent=23 // pred_check
          %p180 = pneg %p52
        $region26: #{tpu_custom_call.1} parent=23 // pred_check_branch
          %182 = sbr.rel (%p180) target = $region28
        $region27: #{tpu_custom_call.1} parent=23 // pred_region
          %p183 = scmp.lt.s32.totalorder %s20, 1
          %s184 = scalar_select %p183, %s20, 1
          %s185 = smul.addr %s184, 4
          %s186 = smul.addr %s185, 8
          %s187 = scalar_lea.vmem %s0, %s186
        $region28: #{tpu_custom_call.1} parent=23 // pred_fallthru
          _
      $region24: #{tpu_custom_call.1} parent=5 // pred_fallthru
        _
      %p188 = scmp.le.s32.totalorder 1, %s13
      %p189 = scmp.lt.s32.totalorder %s13, 3
      %p190 = pnand %p188, %p189
      %p191 = pneg %p190
      // Predicated region
      $region29: #{tpu_custom_call.1} parent=5 // pred_check
        _
      $region30: #{tpu_custom_call.1} parent=5 // pred_check_branch
        %193 = sbr.rel (%p190) target = $region32
      $region31: #{tpu_custom_call.1} parent=5 // pred_region
        %s194 = ssub.s32 %s13, 1
        // Predicated region
        $region33: #{tpu_custom_call.1} parent=31 // pred_check
          %p195 = pneg %p84
        $region34: #{tpu_custom_call.1} parent=31 // pred_check_branch
          %197 = sbr.rel (%p195) target = $region36
        $region35: #{tpu_custom_call.1} parent=31 // pred_region
          %198 = dma.done [#allocation3], 22528
        $region36: #{tpu_custom_call.1} parent=31 // pred_fallthru
          _
        %p199 = scmp.lt.s32.totalorder %s23, 1
        %s200 = scalar_select %p199, %s23, 1
        %s201 = smul.addr %s200, 4
        %s202 = smul.addr %s201, 8
        %s203 = scalar_lea.vmem %s0, %s202
        %p204 = pneg %p58
        %p205 = pneg %p55
        %p206 = pneg %p84
        %p207 = pneg %p81
        %p208 = scmp.lt.s32.totalorder %s25, 0
        %s209 = scalar_select %p208, %s25, 0
        %s210 = scalar_lea.vmem %s2, %s209
        %p211 = pneg %p110
        %p212 = pneg %p107
        %p213 = pneg %p140
        %p214 = pneg %p137
        %s215 = sand.u32 %s127, 1
        %s216 = scalar_lea.sflag [#allocation4], %s215
        %s217 = sand.u32 %s127, 1
        %s218 = smul.addr %s217, 16
        %s219 = scalar_lea.vmem [#allocation5], %s218
        %p220 = scmp.lt.s32.totalorder %s23, 1
        %s221 = scalar_select %p220, %s23, 1
        %s222 = smul.addr %s221, 4
        %s223 = smul.addr %s222, 8
        %s224 = scalar_lea.vmem %s0, %s223
        %p225 = scmp.lt.s32.totalorder %s25, 0
        %s226 = scalar_select %p225, %s25, 0
        %s227 = scalar_lea.vmem %s2, %s226
        %s228 = smul.u32 2, %s24
        %s229 = smul.u32 %s24, 16
        %s230 = scalar_lea.vmem %s224, %s229
        %v231 = vld [vmem:[%s230] sm:$0xff]
        %v232 = vld [vmem:[%s230 + $0x8] sm:$0xff]
        %v233 = vld [vmem:[#allocation2] sm:$0xff]
        %v234 = vld [vmem:[#allocation2 + $0x8] sm:$0xff]
        %v235 = vld [vmem:[#allocation2 + $0x10] sm:$0xff]
        %v236 = vld [vmem:[#allocation2 + $0x18] sm:$0xff]
        %v237 = vld [vmem:[#allocation2 + $0x20] sm:$0xff]
        %v238 = vld [vmem:[#allocation2 + $0x28] sm:$0xff]
        %v239 = vld [vmem:[#allocation2 + $0x30] sm:$0xff]
        %v240 = vld [vmem:[#allocation2 + $0x38] sm:$0xff]
        %v241 = vld [vmem:[#allocation2 + $0x40] sm:$0xff]
        %v242 = vld [vmem:[#allocation2 + $0x48] sm:$0xff]
        %v243 = vld [vmem:[#allocation2 + $0x50] sm:$0xff]
        %v244 = vld [vmem:[#allocation2 + $0x58] sm:$0xff]
        %v245 = vld [vmem:[#allocation2 + $0x60] sm:$0xff]
        %v246 = vld [vmem:[#allocation2 + $0x68] sm:$0xff]
        %v247 = vld [vmem:[#allocation2 + $0x70] sm:$0xff]
        %v248 = vld [vmem:[#allocation2 + $0x78] sm:$0xff]
        %s249 = sadd.s32 %s229, 1
        %s250 = scalar_lea.vmem %s224, %s249
        %v251 = vld [vmem:[%s250] sm:$0xff]
        %v252 = vld [vmem:[%s250 + $0x8] sm:$0xff]
        %s253 = scalar_lea.vmem [#allocation2], 128
        %v254 = vld [vmem:[%s253] sm:$0xff]
        %v255 = vld [vmem:[%s253 + $0x8] sm:$0xff]
        %v256 = vld [vmem:[%s253 + $0x10] sm:$0xff]
        %v257 = vld [vmem:[%s253 + $0x18] sm:$0xff]
        %v258 = vld [vmem:[%s253 + $0x20] sm:$0xff]
        %v259 = vld [vmem:[%s253 + $0x28] sm:$0xff]
        %v260 = vld [vmem:[%s253 + $0x30] sm:$0xff]
        %v261 = vld [vmem:[%s253 + $0x38] sm:$0xff]
        %v262 = vld [vmem:[%s253 + $0x40] sm:$0xff]
        %v263 = vld [vmem:[%s253 + $0x48] sm:$0xff]
        %v264 = vld [vmem:[%s253 + $0x50] sm:$0xff]
        %v265 = vld [vmem:[%s253 + $0x58] sm:$0xff]
        %v266 = vld [vmem:[%s253 + $0x60] sm:$0xff]
        %v267 = vld [vmem:[%s253 + $0x68] sm:$0xff]
        %v268 = vld [vmem:[%s253 + $0x70] sm:$0xff]
        %v269 = vld [vmem:[%s253 + $0x78] sm:$0xff]
        %270 = vmatprep.subr.mxu0 0.0
        %271 = vmatpush1.msra.mxu0 %v254
        %272 = vmatprep.subr.mxu0 0.0
        %273 = vmatpush1.msra.mxu0 %v255
        %274 = vmatprep.subr.mxu0 0.0
        %275 = vmatpush1.msra.mxu0 %v256
        %276 = vmatprep.subr.mxu0 0.0
        %277 = vmatpush1.msra.mxu0 %v257
        %278 = vmatprep.subr.mxu0 0.0
        %279 = vmatpush1.msra.mxu0 %v258
        %280 = vmatprep.subr.mxu0 0.0
        %281 = vmatpush1.msra.mxu0 %v259
        %282 = vmatprep.subr.mxu0 0.0
        %283 = vmatpush1.msra.mxu0 %v260
        %284 = vmatprep.subr.mxu0 0.0
        %285 = vmatpush1.msra.mxu0 %v261
        %286 = vmatprep.subr.mxu0 0.0
        %287 = vmatpush1.msra.mxu0 %v262
        %288 = vmatprep.subr.mxu0 0.0
        %289 = vmatpush1.msra.mxu0 %v263
        %290 = vmatprep.subr.mxu0 0.0
        %291 = vmatpush1.msra.mxu0 %v264
        %292 = vmatprep.subr.mxu0 0.0
        %293 = vmatpush1.msra.mxu0 %v265
        %294 = vmatprep.subr.mxu0 0.0
        %295 = vmatpush1.msra.mxu0 %v266
        %296 = vmatprep.subr.mxu0 0.0
        %297 = vmatpush1.msra.mxu0 %v267
        %298 = vmatprep.subr.mxu0 0.0
        %299 = vmatpush1.msra.mxu0 %v268
        %300 = vmatprep.subr.mxu0 0.0
        %301 = vmatpush1.msra.mxu0 %v269
        %302 = vmatprep.subr.mxu0 0.0
        %303 = vmatpush1.msra.mxu0 0.0
        %304 = vmatprep.subr.mxu0 0.0
        %305 = vmatpush1.msra.mxu0 0.0
        %306 = vmatprep.subr.mxu0 0.0
        %307 = vmatpush1.msra.mxu0 0.0
        %308 = vmatprep.subr.mxu0 0.0
        %309 = vmatpush1.msra.mxu0 0.0
        %310 = vmatprep.subr.mxu0 0.0
        %311 = vmatpush1.msra.mxu0 0.0
        %312 = vmatprep.subr.mxu0 0.0
        %313 = vmatpush1.msra.mxu0 0.0
        %314 = vmatprep.subr.mxu0 0.0
        %315 = vmatpush1.msra.mxu0 0.0
        %316 = vmatprep.subr.mxu0 0.0
        %317 = vmatpush1.msra.mxu0 0.0
        %318 = vmatprep.subr.mxu0 0.0
        %319 = vmatpush1.msra.mxu0 0.0
        %320 = vmatprep.subr.mxu0 0.0
        %321 = vmatpush1.msra.mxu0 0.0
        %322 = vmatprep.subr.mxu0 0.0
        %323 = vmatpush1.msra.mxu0 0.0
        %324 = vmatprep.subr.mxu0 0.0
        %325 = vmatpush1.msra.mxu0 0.0
        %326 = vmatprep.subr.mxu0 0.0
        %327 = vmatpush1.msra.mxu0 0.0
        %328 = vmatprep.subr.mxu0 0.0
        %329 = vmatpush1.msra.mxu0 0.0
        %330 = vmatprep.subr.mxu0 0.0
        %331 = vmatpush1.msra.mxu0 0.0
        %332 = vmatprep.subr.mxu0 0.0
        %333 = vmatpush1.msra.mxu0 0.0
        %334 = vmatprep.mubr.f32.mxu0 0.0
        %335 = vmatmul.mubr.f32.gmra.mrb[0].mxu0 %v251
        %v336 = vpop.f32.mrb[0].mxu0
        %v337 = vadd.f32 0.0, %v336
        %v338 = vpop.f32.mrb[0].mxu0
        %339 = vmatprep.mubr.f32.mxu0 0.0
        %340 = vmatmul.mubr.f32.gmra.mrb[0].mxu0 %v252
        %v341 = vpop.f32.mrb[0].mxu0
        %v342 = vadd.f32 0.0, %v341
        %v343 = vpop.f32.mrb[0].mxu0
        %344 = vdwg.mxu0
        %345 = vmatprep.subr.mxu0 0.0
        %346 = vmatpush1.msra.mxu0 %v233
        %347 = vmatprep.subr.mxu0 0.0
        %348 = vmatpush1.msra.mxu0 %v234
        %349 = vmatprep.subr.mxu0 0.0
        %350 = vmatpush1.msra.mxu0 %v235
        %351 = vmatprep.subr.mxu0 0.0
        %352 = vmatpush1.msra.mxu0 %v236
        %353 = vmatprep.subr.mxu0 0.0
        %354 = vmatpush1.msra.mxu0 %v237
        %355 = vmatprep.subr.mxu0 0.0
        %356 = vmatpush1.msra.mxu0 %v238
        %357 = vmatprep.subr.mxu0 0.0
        %358 = vmatpush1.msra.mxu0 %v239
        %359 = vmatprep.subr.mxu0 0.0
        %360 = vmatpush1.msra.mxu0 %v240
        %361 = vmatprep.subr.mxu0 0.0
        %362 = vmatpush1.msra.mxu0 %v241
        %363 = vmatprep.subr.mxu0 0.0
        %364 = vmatpush1.msra.mxu0 %v242
        %365 = vmatprep.subr.mxu0 0.0
        %366 = vmatpush1.msra.mxu0 %v243
        %367 = vmatprep.subr.mxu0 0.0
        %368 = vmatpush1.msra.mxu0 %v244
        %369 = vmatprep.subr.mxu0 0.0
        %370 = vmatpush1.msra.mxu0 %v245
        %371 = vmatprep.subr.mxu0 0.0
        %372 = vmatpush1.msra.mxu0 %v246
        %373 = vmatprep.subr.mxu0 0.0
        %374 = vmatpush1.msra.mxu0 %v247
        %375 = vmatprep.subr.mxu0 0.0
        %376 = vmatpush1.msra.mxu0 %v248
        %377 = vmatprep.subr.mxu0 0.0
        %378 = vmatpush1.msra.mxu0 0.0
        %379 = vmatprep.subr.mxu0 0.0
        %380 = vmatpush1.msra.mxu0 0.0
        %381 = vmatprep.subr.mxu0 0.0
        %382 = vmatpush1.msra.mxu0 0.0
        %383 = vmatprep.subr.mxu0 0.0
        %384 = vmatpush1.msra.mxu0 0.0
        %385 = vmatprep.subr.mxu0 0.0
        %386 = vmatpush1.msra.mxu0 0.0
        %387 = vmatprep.subr.mxu0 0.0
        %388 = vmatpush1.msra.mxu0 0.0
        %389 = vmatprep.subr.mxu0 0.0
        %390 = vmatpush1.msra.mxu0 0.0
        %391 = vmatprep.subr.mxu0 0.0
        %392 = vmatpush1.msra.mxu0 0.0
        %393 = vmatprep.subr.mxu0 0.0
        %394 = vmatpush1.msra.mxu0 0.0
        %395 = vmatprep.subr.mxu0 0.0
        %396 = vmatpush1.msra.mxu0 0.0
        %397 = vmatprep.subr.mxu0 0.0
        %398 = vmatpush1.msra.mxu0 0.0
        %399 = vmatprep.subr.mxu0 0.0
        %400 = vmatpush1.msra.mxu0 0.0
        %401 = vmatprep.subr.mxu0 0.0
        %402 = vmatpush1.msra.mxu0 0.0
        %403 = vmatprep.subr.mxu0 0.0
        %404 = vmatpush1.msra.mxu0 0.0
        %405 = vmatprep.subr.mxu0 0.0
        %406 = vmatpush1.msra.mxu0 0.0
        %407 = vmatprep.subr.mxu0 0.0
        %408 = vmatpush1.msra.mxu0 0.0
        %409 = vmatprep.mubr.f32.mxu0 0.0
        %410 = vmatmul.mubr.f32.gmra.mrb[0].mxu0 %v231
        %v411 = vpop.f32.mrb[0].mxu0
        %v412 = vadd.f32 %v337, %v411
        %v413 = vpop.f32.mrb[0].mxu0
        %414 = vmatprep.mubr.f32.mxu0 0.0
        %415 = vmatmul.mubr.f32.gmra.mrb[0].mxu0 %v232
        %v416 = vpop.f32.mrb[0].mxu0
        %v417 = vadd.f32 %v342, %v416
        %v418 = vpop.f32.mrb[0].mxu0
        %419 = vdwg.mxu0
        %s420 = sadd.s32 %s229, 2
        %s421 = scalar_lea.vmem %s224, %s420
        %v422 = vld [vmem:[%s421] sm:$0xff]
        %v423 = vld [vmem:[%s421 + $0x8] sm:$0xff]
        %s424 = scalar_lea.vmem [#allocation2], 256
        %v425 = vld [vmem:[%s424] sm:$0xff]
        %v426 = vld [vmem:[%s424 + $0x8] sm:$0xff]
        %v427 = vld [vmem:[%s424 + $0x10] sm:$0xff]
        %v428 = vld [vmem:[%s424 + $0x18] sm:$0xff]
        %v429 = vld [vmem:[%s424 + $0x20] sm:$0xff]
        %v430 = vld [vmem:[%s424 + $0x28] sm:$0xff]
        %v431 = vld [vmem:[%s424 + $0x30] sm:$0xff]
        %v432 = vld [vmem:[%s424 + $0x38] sm:$0xff]
        %v433 = vld [vmem:[%s424 + $0x40] sm:$0xff]
        %v434 = vld [vmem:[%s424 + $0x48] sm:$0xff]
        %v435 = vld [vmem:[%s424 + $0x50] sm:$0xff]
        %v436 = vld [vmem:[%s424 + $0x58] sm:$0xff]
        %v437 = vld [vmem:[%s424 + $0x60] sm:$0xff]
        %v438 = vld [vmem:[%s424 + $0x68] sm:$0xff]
        %v439 = vld [vmem:[%s424 + $0x70] sm:$0xff]
        %v440 = vld [vmem:[%s424 + $0x78] sm:$0xff]
        %441 = vmatprep.subr.mxu0 0.0
        %442 = vmatpush1.msra.mxu0 %v425
        %443 = vmatprep.subr.mxu0 0.0
        %444 = vmatpush1.msra.mxu0 %v426
        %445 = vmatprep.subr.mxu0 0.0
        %446 = vmatpush1.msra.mxu0 %v427
        %447 = vmatprep.subr.mxu0 0.0
        %448 = vmatpush1.msra.mxu0 %v428
        %449 = vmatprep.subr.mxu0 0.0
        %450 = vmatpush1.msra.mxu0 %v429
        %451 = vmatprep.subr.mxu0 0.0
        %452 = vmatpush1.msra.mxu0 %v430
        %453 = vmatprep.subr.mxu0 0.0
        %454 = vmatpush1.msra.mxu0 %v431
        %455 = vmatprep.subr.mxu0 0.0
        %456 = vmatpush1.msra.mxu0 %v432
        %457 = vmatprep.subr.mxu0 0.0
        %458 = vmatpush1.msra.mxu0 %v433
        %459 = vmatprep.subr.mxu0 0.0
        %460 = vmatpush1.msra.mxu0 %v434
        %461 = vmatprep.subr.mxu0 0.0
        %462 = vmatpush1.msra.mxu0 %v435
        %463 = vmatprep.subr.mxu0 0.0
        %464 = vmatpush1.msra.mxu0 %v436
        %465 = vmatprep.subr.mxu0 0.0
        %466 = vmatpush1.msra.mxu0 %v437
        %467 = vmatprep.subr.mxu0 0.0
        %468 = vmatpush1.msra.mxu0 %v438
        %469 = vmatprep.subr.mxu0 0.0
        %470 = vmatpush1.msra.mxu0 %v439
        %471 = vmatprep.subr.mxu0 0.0
        %472 = vmatpush1.msra.mxu0 %v440
        %473 = vmatprep.subr.mxu0 0.0
        %474 = vmatpush1.msra.mxu0 0.0
        %475 = vmatprep.subr.mxu0 0.0
        %476 = vmatpush1.msra.mxu0 0.0
        %477 = vmatprep.subr.mxu0 0.0
        %478 = vmatpush1.msra.mxu0 0.0
        %479 = vmatprep.subr.mxu0 0.0
        %480 = vmatpush1.msra.mxu0 0.0
        %481 = vmatprep.subr.mxu0 0.0
        %482 = vmatpush1.msra.mxu0 0.0
        %483 = vmatprep.subr.mxu0 0.0
        %484 = vmatpush1.msra.mxu0 0.0
        %485 = vmatprep.subr.mxu0 0.0
        %486 = vmatpush1.msra.mxu0 0.0
        %487 = vmatprep.subr.mxu0 0.0
        %488 = vmatpush1.msra.mxu0 0.0
        %489 = vmatprep.subr.mxu0 0.0
        %490 = vmatpush1.msra.mxu0 0.0
        %491 = vmatprep.subr.mxu0 0.0
        %492 = vmatpush1.msra.mxu0 0.0
        %493 = vmatprep.subr.mxu0 0.0
        %494 = vmatpush1.msra.mxu0 0.0
        %495 = vmatprep.subr.mxu0 0.0
        %496 = vmatpush1.msra.mxu0 0.0
        %497 = vmatprep.subr.mxu0 0.0
        %498 = vmatpush1.msra.mxu0 0.0
        %499 = vmatprep.subr.mxu0 0.0
        %500 = vmatpush1.msra.mxu0 0.0
        %501 = vmatprep.subr.mxu0 0.0
        %502 = vmatpush1.msra.mxu0 0.0
        %503 = vmatprep.subr.mxu0 0.0
        %504 = vmatpush1.msra.mxu0 0.0
        %505 = vmatprep.mubr.f32.mxu0 0.0
        %506 = vmatmul.mubr.f32.gmra.mrb[0].mxu0 %v422
        %v507 = vpop.f32.mrb[0].mxu0
        %v508 = vadd.f32 0.0, %v507
        %v509 = vpop.f32.mrb[0].mxu0
        %510 = vmatprep.mubr.f32.mxu0 0.0
        %511 = vmatmul.mubr.f32.gmra.mrb[0].mxu0 %v423
        %v512 = vpop.f32.mrb[0].mxu0
        %v513 = vadd.f32 0.0, %v512
        %v514 = vpop.f32.mrb[0].mxu0
        %515 = vdwg.mxu0
        %v516 = vadd.f32 %v412, %v508
        %v517 = vadd.f32 %v417, %v513
        %s518 = sadd.s32 %s229, 3
        %s519 = scalar_lea.vmem %s224, %s518
        %v520 = vld [vmem:[%s519] sm:$0xff]
        %v521 = vld [vmem:[%s519 + $0x8] sm:$0xff]
        %s522 = scalar_lea.vmem [#allocation2], 384
        %v523 = vld [vmem:[%s522] sm:$0xff]
        %v524 = vld [vmem:[%s522 + $0x8] sm:$0xff]
        %v525 = vld [vmem:[%s522 + $0x10] sm:$0xff]
        %v526 = vld [vmem:[%s522 + $0x18] sm:$0xff]
        %v527 = vld [vmem:[%s522 + $0x20] sm:$0xff]
        %v528 = vld [vmem:[%s522 + $0x28] sm:$0xff]
        %v529 = vld [vmem:[%s522 + $0x30] sm:$0xff]
        %v530 = vld [vmem:[%s522 + $0x38] sm:$0xff]
        %v531 = vld [vmem:[%s522 + $0x40] sm:$0xff]
        %v532 = vld [vmem:[%s522 + $0x48] sm:$0xff]
        %v533 = vld [vmem:[%s522 + $0x50] sm:$0xff]
        %v534 = vld [vmem:[%s522 + $0x58] sm:$0xff]
        %v535 = vld [vmem:[%s522 + $0x60] sm:$0xff]
        %v536 = vld [vmem:[%s522 + $0x68] sm:$0xff]
        %v537 = vld [vmem:[%s522 + $0x70] sm:$0xff]
        %v538 = vld [vmem:[%s522 + $0x78] sm:$0xff]
        %539 = vmatprep.subr.mxu0 0.0
        %540 = vmatpush1.msra.mxu0 %v523
        %541 = vmatprep.subr.mxu0 0.0
        %542 = vmatpush1.msra.mxu0 %v524
        %543 = vmatprep.subr.mxu0 0.0
        %544 = vmatpush1.msra.mxu0 %v525
        %545 = vmatprep.subr.mxu0 0.0
        %546 = vmatpush1.msra.mxu0 %v526
        %547 = vmatprep.subr.mxu0 0.0
        %548 = vmatpush1.msra.mxu0 %v527
        %549 = vmatprep.subr.mxu0 0.0
        %550 = vmatpush1.msra.mxu0 %v528
        %551 = vmatprep.subr.mxu0 0.0
        %552 = vmatpush1.msra.mxu0 %v529
        %553 = vmatprep.subr.mxu0 0.0
        %554 = vmatpush1.msra.mxu0 %v530
        %555 = vmatprep.subr.mxu0 0.0
        %556 = vmatpush1.msra.mxu0 %v531
        %557 = vmatprep.subr.mxu0 0.0
        %558 = vmatpush1.msra.mxu0 %v532
        %559 = vmatprep.subr.mxu0 0.0
        %560 = vmatpush1.msra.mxu0 %v533
        %561 = vmatprep.subr.mxu0 0.0
        %562 = vmatpush1.msra.mxu0 %v534
        %563 = vmatprep.subr.mxu0 0.0
        %564 = vmatpush1.msra.mxu0 %v535
        %565 = vmatprep.subr.mxu0 0.0
        %566 = vmatpush1.msra.mxu0 %v536
        %567 = vmatprep.subr.mxu0 0.0
        %568 = vmatpush1.msra.mxu0 %v537
        %569 = vmatprep.subr.mxu0 0.0
        %570 = vmatpush1.msra.mxu0 %v538
        %571 = vmatprep.subr.mxu0 0.0
        %572 = vmatpush1.msra.mxu0 0.0
        %573 = vmatprep.subr.mxu0 0.0
        %574 = vmatpush1.msra.mxu0 0.0
        %575 = vmatprep.subr.mxu0 0.0
        %576 = vmatpush1.msra.mxu0 0.0
        %577 = vmatprep.subr.mxu0 0.0
        %578 = vmatpush1.msra.mxu0 0.0
        %579 = vmatprep.subr.mxu0 0.0
        %580 = vmatpush1.msra.mxu0 0.0
        %581 = vmatprep.subr.mxu0 0.0
        %582 = vmatpush1.msra.mxu0 0.0
        %583 = vmatprep.subr.mxu0 0.0
        %584 = vmatpush1.msra.mxu0 0.0
        %585 = vmatprep.subr.mxu0 0.0
        %586 = vmatpush1.msra.mxu0 0.0
        %587 = vmatprep.subr.mxu0 0.0
        %588 = vmatpush1.msra.mxu0 0.0
        %589 = vmatprep.subr.mxu0 0.0
        %590 = vmatpush1.msra.mxu0 0.0
        %591 = vmatprep.subr.mxu0 0.0
        %592 = vmatpush1.msra.mxu0 0.0
        %593 = vmatprep.subr.mxu0 0.0
        %594 = vmatpush1.msra.mxu0 0.0
        %595 = vmatprep.subr.mxu0 0.0
        %596 = vmatpush1.msra.mxu0 0.0
        %597 = vmatprep.subr.mxu0 0.0
        %598 = vmatpush1.msra.mxu0 0.0
        %599 = vmatprep.subr.mxu0 0.0
        %600 = vmatpush1.msra.mxu0 0.0
        %601 = vmatprep.subr.mxu0 0.0
        %602 = vmatpush1.msra.mxu0 0.0
        %603 = vmatprep.mubr.f32.mxu0 0.0
        %604 = vmatmul.mubr.f32.gmra.mrb[0].mxu0 %v520
        %v605 = vpop.f32.mrb[0].mxu0
        %v606 = vadd.f32 0.0, %v605
        %v607 = vpop.f32.mrb[0].mxu0
        %608 = vmatprep.mubr.f32.mxu0 0.0
        %609 = vmatmul.mubr.f32.gmra.mrb[0].mxu0 %v521
        %v610 = vpop.f32.mrb[0].mxu0
        %v611 = vadd.f32 0.0, %v610
        %v612 = vpop.f32.mrb[0].mxu0
        %613 = vdwg.mxu0
        %v614 = vadd.f32 %v516, %v606
        %v615 = vadd.f32 %v517, %v611
        %s616 = sadd.s32 %s229, 4
        %s617 = scalar_lea.vmem %s224, %s616
        %v618 = vld [vmem:[%s617] sm:$0xff]
        %v619 = vld [vmem:[%s617 + $0x8] sm:$0xff]
        %s620 = scalar_lea.vmem [#allocation2], 512
        %v621 = vld [vmem:[%s620] sm:$0xff]
        %v622 = vld [vmem:[%s620 + $0x8] sm:$0xff]
        %v623 = vld [vmem:[%s620 + $0x10] sm:$0xff]
        %v624 = vld [vmem:[%s620 + $0x18] sm:$0xff]
        %v625 = vld [vmem:[%s620 + $0x20] sm:$0xff]
        %v626 = vld [vmem:[%s620 + $0x28] sm:$0xff]
        %v627 = vld [vmem:[%s620 + $0x30] sm:$0xff]
        %v628 = vld [vmem:[%s620 + $0x38] sm:$0xff]
        %v629 = vld [vmem:[%s620 + $0x40] sm:$0xff]
        %v630 = vld [vmem:[%s620 + $0x48] sm:$0xff]
        %v631 = vld [vmem:[%s620 + $0x50] sm:$0xff]
        %v632 = vld [vmem:[%s620 + $0x58] sm:$0xff]
        %v633 = vld [vmem:[%s620 + $0x60] sm:$0xff]
        %v634 = vld [vmem:[%s620 + $0x68] sm:$0xff]
        %v635 = vld [vmem:[%s620 + $0x70] sm:$0xff]
        %v636 = vld [vmem:[%s620 + $0x78] sm:$0xff]
        %637 = vmatprep.subr.mxu0 0.0
        %638 = vmatpush1.msra.mxu0 %v621
        %639 = vmatprep.subr.mxu0 0.0
        %640 = vmatpush1.msra.mxu0 %v622
        %641 = vmatprep.subr.mxu0 0.0
        %642 = vmatpush1.msra.mxu0 %v623
        %643 = vmatprep.subr.mxu0 0.0
        %644 = vmatpush1.msra.mxu0 %v624
        %645 = vmatprep.subr.mxu0 0.0
        %646 = vmatpush1.msra.mxu0 %v625
        %647 = vmatprep.subr.mxu0 0.0
        %648 = vmatpush1.msra.mxu0 %v626
        %649 = vmatprep.subr.mxu0 0.0
        %650 = vmatpush1.msra.mxu0 %v627
        %651 = vmatprep.subr.mxu0 0.0
        %652 = vmatpush1.msra.mxu0 %v628
        %653 = vmatprep.subr.mxu0 0.0
        %654 = vmatpush1.msra.mxu0 %v629
        %655 = vmatprep.subr.mxu0 0.0
        %656 = vmatpush1.msra.mxu0 %v630
        %657 = vmatprep.subr.mxu0 0.0
        %658 = vmatpush1.msra.mxu0 %v631
        %659 = vmatprep.subr.mxu0 0.0
        %660 = vmatpush1.msra.mxu0 %v632
        %661 = vmatprep.subr.mxu0 0.0
        %662 = vmatpush1.msra.mxu0 %v633
        %663 = vmatprep.subr.mxu0 0.0
        %664 = vmatpush1.msra.mxu0 %v634
        %665 = vmatprep.subr.mxu0 0.0
        %666 = vmatpush1.msra.mxu0 %v635
        %667 = vmatprep.subr.mxu0 0.0
        %668 = vmatpush1.msra.mxu0 %v636
        %669 = vmatprep.subr.mxu0 0.0
        %670 = vmatpush1.msra.mxu0 0.0
        %671 = vmatprep.subr.mxu0 0.0
        %672 = vmatpush1.msra.mxu0 0.0
        %673 = vmatprep.subr.mxu0 0.0
        %674 = vmatpush1.msra.mxu0 0.0
        %675 = vmatprep.subr.mxu0 0.0
        %676 = vmatpush1.msra.mxu0 0.0
        %677 = vmatprep.subr.mxu0 0.0
        %678 = vmatpush1.msra.mxu0 0.0
        %679 = vmatprep.subr.mxu0 0.0
        %680 = vmatpush1.msra.mxu0 0.0
        %681 = vmatprep.subr.mxu0 0.0
        %682 = vmatpush1.msra.mxu0 0.0
        %683 = vmatprep.subr.mxu0 0.0
        %684 = vmatpush1.msra.mxu0 0.0
        %685 = vmatprep.subr.mxu0 0.0
        %686 = vmatpush1.msra.mxu0 0.0
        %687 = vmatprep.subr.mxu0 0.0
        %688 = vmatpush1.msra.mxu0 0.0
        %689 = vmatprep.subr.mxu0 0.0
        %690 = vmatpush1.msra.mxu0 0.0
        %691 = vmatprep.subr.mxu0 0.0
        %692 = vmatpush1.msra.mxu0 0.0
        %693 = vmatprep.subr.mxu0 0.0
        %694 = vmatpush1.msra.mxu0 0.0
        %695 = vmatprep.subr.mxu0 0.0
        %696 = vmatpush1.msra.mxu0 0.0
        %697 = vmatprep.subr.mxu0 0.0
        %698 = vmatpush1.msra.mxu0 0.0
        %699 = vmatprep.subr.mxu0 0.0
        %700 = vmatpush1.msra.mxu0 0.0
        %701 = vmatprep.mubr.f32.mxu0 0.0
        %702 = vmatmul.mubr.f32.gmra.mrb[0].mxu0 %v618
        %v703 = vpop.f32.mrb[0].mxu0
        %v704 = vadd.f32 0.0, %v703
        %v705 = vpop.f32.mrb[0].mxu0
        %706 = vmatprep.mubr.f32.mxu0 0.0
        %707 = vmatmul.mubr.f32.gmra.mrb[0].mxu0 %v619
        %v708 = vpop.f32.mrb[0].mxu0
        %v709 = vadd.f32 0.0, %v708
        %v710 = vpop.f32.mrb[0].mxu0
        %711 = vdwg.mxu0
        %v712 = vadd.f32 %v614, %v704
        %v713 = vadd.f32 %v615, %v709
        %s714 = sadd.s32 %s229, 5
        %s715 = scalar_lea.vmem %s224, %s714
        %v716 = vld [vmem:[%s715] sm:$0xff]
        %v717 = vld [vmem:[%s715 + $0x8] sm:$0xff]
        %s718 = scalar_lea.vmem [#allocation2], 640
        %v719 = vld [vmem:[%s718] sm:$0xff]
        %v720 = vld [vmem:[%s718 + $0x8] sm:$0xff]
        %v721 = vld [vmem:[%s718 + $0x10] sm:$0xff]
        %v722 = vld [vmem:[%s718 + $0x18] sm:$0xff]
        %v723 = vld [vmem:[%s718 + $0x20] sm:$0xff]
        %v724 = vld [vmem:[%s718 + $0x28] sm:$0xff]
        %v725 = vld [vmem:[%s718 + $0x30] sm:$0xff]
        %v726 = vld [vmem:[%s718 + $0x38] sm:$0xff]
        %v727 = vld [vmem:[%s718 + $0x40] sm:$0xff]
        %v728 = vld [vmem:[%s718 + $0x48] sm:$0xff]
        %v729 = vld [vmem:[%s718 + $0x50] sm:$0xff]
        %v730 = vld [vmem:[%s718 + $0x58] sm:$0xff]
        %v731 = vld [vmem:[%s718 + $0x60] sm:$0xff]
        %v732 = vld [vmem:[%s718 + $0x68] sm:$0xff]
        %v733 = vld [vmem:[%s718 + $0x70] sm:$0xff]
        %v734 = vld [vmem:[%s718 + $0x78] sm:$0xff]
        %735 = vmatprep.subr.mxu0 0.0
        %736 = vmatpush1.msra.mxu0 %v719
        %737 = vmatprep.subr.mxu0 0.0
        %738 = vmatpush1.msra.mxu0 %v720
        %739 = vmatprep.subr.mxu0 0.0
        %740 = vmatpush1.msra.mxu0 %v721
        %741 = vmatprep.subr.mxu0 0.0
        %742 = vmatpush1.msra.mxu0 %v722
        %743 = vmatprep.subr.mxu0 0.0
        %744 = vmatpush1.msra.mxu0 %v723
        %745 = vmatprep.subr.mxu0 0.0
        %746 = vmatpush1.msra.mxu0 %v724
        %747 = vmatprep.subr.mxu0 0.0
        %748 = vmatpush1.msra.mxu0 %v725
        %749 = vmatprep.subr.mxu0 0.0
        %750 = vmatpush1.msra.mxu0 %v726
        %751 = vmatprep.subr.mxu0 0.0
        %752 = vmatpush1.msra.mxu0 %v727
        %753 = vmatprep.subr.mxu0 0.0
        %754 = vmatpush1.msra.mxu0 %v728
        %755 = vmatprep.subr.mxu0 0.0
        %756 = vmatpush1.msra.mxu0 %v729
        %757 = vmatprep.subr.mxu0 0.0
        %758 = vmatpush1.msra.mxu0 %v730
        %759 = vmatprep.subr.mxu0 0.0
        %760 = vmatpush1.msra.mxu0 %v731
        %761 = vmatprep.subr.mxu0 0.0
        %762 = vmatpush1.msra.mxu0 %v732
        %763 = vmatprep.subr.mxu0 0.0
        %764 = vmatpush1.msra.mxu0 %v733
        %765 = vmatprep.subr.mxu0 0.0
        %766 = vmatpush1.msra.mxu0 %v734
        %767 = vmatprep.subr.mxu0 0.0
        %768 = vmatpush1.msra.mxu0 0.0
        %769 = vmatprep.subr.mxu0 0.0
        %770 = vmatpush1.msra.mxu0 0.0
        %771 = vmatprep.subr.mxu0 0.0
        %772 = vmatpush1.msra.mxu0 0.0
        %773 = vmatprep.subr.mxu0 0.0
        %774 = vmatpush1.msra.mxu0 0.0
        %775 = vmatprep.subr.mxu0 0.0
        %776 = vmatpush1.msra.mxu0 0.0
        %777 = vmatprep.subr.mxu0 0.0
        %778 = vmatpush1.msra.mxu0 0.0
        %779 = vmatprep.subr.mxu0 0.0
        %780 = vmatpush1.msra.mxu0 0.0
        %781 = vmatprep.subr.mxu0 0.0
        %782 = vmatpush1.msra.mxu0 0.0
        %783 = vmatprep.subr.mxu0 0.0
        %784 = vmatpush1.msra.mxu0 0.0
        %785 = vmatprep.subr.mxu0 0.0
        %786 = vmatpush1.msra.mxu0 0.0
        %787 = vmatprep.subr.mxu0 0.0
        %788 = vmatpush1.msra.mxu0 0.0
        %789 = vmatprep.subr.mxu0 0.0
        %790 = vmatpush1.msra.mxu0 0.0
        %791 = vmatprep.subr.mxu0 0.0
        %792 = vmatpush1.msra.mxu0 0.0
        %793 = vmatprep.subr.mxu0 0.0
        %794 = vmatpush1.msra.mxu0 0.0
        %795 = vmatprep.subr.mxu0 0.0
        %796 = vmatpush1.msra.mxu0 0.0
        %797 = vmatprep.subr.mxu0 0.0
        %798 = vmatpush1.msra.mxu0 0.0
        %799 = vmatprep.mubr.f32.mxu0 0.0
        %800 = vmatmul.mubr.f32.gmra.mrb[0].mxu0 %v716
        %v801 = vpop.f32.mrb[0].mxu0
        %v802 = vadd.f32 0.0, %v801
        %v803 = vpop.f32.mrb[0].mxu0
        %804 = vmatprep.mubr.f32.mxu0 0.0
        %805 = vmatmul.mubr.f32.gmra.mrb[0].mxu0 %v717
        %v806 = vpop.f32.mrb[0].mxu0
        %v807 = vadd.f32 0.0, %v806
        %v808 = vpop.f32.mrb[0].mxu0
        %809 = vdwg.mxu0
        %v810 = vadd.f32 %v712, %v802
        %v811 = vadd.f32 %v713, %v807
        %s812 = sadd.s32 %s229, 6
        %s813 = scalar_lea.vmem %s224, %s812
        %v814 = vld [vmem:[%s813] sm:$0xff]
        %v815 = vld [vmem:[%s813 + $0x8] sm:$0xff]
        %s816 = scalar_lea.vmem [#allocation2], 768
        %v817 = vld [vmem:[%s816] sm:$0xff]
        %v818 = vld [vmem:[%s816 + $0x8] sm:$0xff]
        %v819 = vld [vmem:[%s816 + $0x10] sm:$0xff]
        %v820 = vld [vmem:[%s816 + $0x18] sm:$0xff]
        %v821 = vld [vmem:[%s816 + $0x20] sm:$0xff]
        %v822 = vld [vmem:[%s816 + $0x28] sm:$0xff]
        %v823 = vld [vmem:[%s816 + $0x30] sm:$0xff]
        %v824 = vld [vmem:[%s816 + $0x38] sm:$0xff]
        %v825 = vld [vmem:[%s816 + $0x40] sm:$0xff]
        %v826 = vld [vmem:[%s816 + $0x48] sm:$0xff]
        %v827 = vld [vmem:[%s816 + $0x50] sm:$0xff]
        %v828 = vld [vmem:[%s816 + $0x58] sm:$0xff]
        %v829 = vld [vmem:[%s816 + $0x60] sm:$0xff]
        %v830 = vld [vmem:[%s816 + $0x68] sm:$0xff]
        %v831 = vld [vmem:[%s816 + $0x70] sm:$0xff]
        %v832 = vld [vmem:[%s816 + $0x78] sm:$0xff]
        %833 = vmatprep.subr.mxu0 0.0
        %834 = vmatpush1.msra.mxu0 %v817
        %835 = vmatprep.subr.mxu0 0.0
        %836 = vmatpush1.msra.mxu0 %v818
        %837 = vmatprep.subr.mxu0 0.0
        %838 = vmatpush1.msra.mxu0 %v819
        %839 = vmatprep.subr.mxu0 0.0
        %840 = vmatpush1.msra.mxu0 %v820
        %841 = vmatprep.subr.mxu0 0.0
        %842 = vmatpush1.msra.mxu0 %v821
        %843 = vmatprep.subr.mxu0 0.0
        %844 = vmatpush1.msra.mxu0 %v822
        %845 = vmatprep.subr.mxu0 0.0
        %846 = vmatpush1.msra.mxu0 %v823
        %847 = vmatprep.subr.mxu0 0.0
        %848 = vmatpush1.msra.mxu0 %v824
        %849 = vmatprep.subr.mxu0 0.0
        %850 = vmatpush1.msra.mxu0 %v825
        %851 = vmatprep.subr.mxu0 0.0
        %852 = vmatpush1.msra.mxu0 %v826
        %853 = vmatprep.subr.mxu0 0.0
        %854 = vmatpush1.msra.mxu0 %v827
        %855 = vmatprep.subr.mxu0 0.0
        %856 = vmatpush1.msra.mxu0 %v828
        %857 = vmatprep.subr.mxu0 0.0
        %858 = vmatpush1.msra.mxu0 %v829
        %859 = vmatprep.subr.mxu0 0.0
        %860 = vmatpush1.msra.mxu0 %v830
        %861 = vmatprep.subr.mxu0 0.0
        %862 = vmatpush1.msra.mxu0 %v831
        %863 = vmatprep.subr.mxu0 0.0
        %864 = vmatpush1.msra.mxu0 %v832
        %865 = vmatprep.subr.mxu0 0.0
        %866 = vmatpush1.msra.mxu0 0.0
        %867 = vmatprep.subr.mxu0 0.0
        %868 = vmatpush1.msra.mxu0 0.0
        %869 = vmatprep.subr.mxu0 0.0
        %870 = vmatpush1.msra.mxu0 0.0
        %871 = vmatprep.subr.mxu0 0.0
        %872 = vmatpush1.msra.mxu0 0.0
        %873 = vmatprep.subr.mxu0 0.0
        %874 = vmatpush1.msra.mxu0 0.0
        %875 = vmatprep.subr.mxu0 0.0
        %876 = vmatpush1.msra.mxu0 0.0
        %877 = vmatprep.subr.mxu0 0.0
        %878 = vmatpush1.msra.mxu0 0.0
        %879 = vmatprep.subr.mxu0 0.0
        %880 = vmatpush1.msra.mxu0 0.0
        %881 = vmatprep.subr.mxu0 0.0
        %882 = vmatpush1.msra.mxu0 0.0
        %883 = vmatprep.subr.mxu0 0.0
        %884 = vmatpush1.msra.mxu0 0.0
        %885 = vmatprep.subr.mxu0 0.0
        %886 = vmatpush1.msra.mxu0 0.0
        %887 = vmatprep.subr.mxu0 0.0
        %888 = vmatpush1.msra.mxu0 0.0
        %889 = vmatprep.subr.mxu0 0.0
        %890 = vmatpush1.msra.mxu0 0.0
        %891 = vmatprep.subr.mxu0 0.0
        %892 = vmatpush1.msra.mxu0 0.0
        %893 = vmatprep.subr.mxu0 0.0
        %894 = vmatpush1.msra.mxu0 0.0
        %895 = vmatprep.subr.mxu0 0.0
        %896 = vmatpush1.msra.mxu0 0.0
        %897 = vmatprep.mubr.f32.mxu0 0.0
        %898 = vmatmul.mubr.f32.gmra.mrb[0].mxu0 %v814
        %v899 = vpop.f32.mrb[0].mxu0
        %v900 = vadd.f32 0.0, %v899
        %v901 = vpop.f32.mrb[0].mxu0
        %902 = vmatprep.mubr.f32.mxu0 0.0
        %903 = vmatmul.mubr.f32.gmra.mrb[0].mxu0 %v815
        %v904 = vpop.f32.mrb[0].mxu0
        %v905 = vadd.f32 0.0, %v904
        %v906 = vpop.f32.mrb[0].mxu0
        %907 = vdwg.mxu0
        %v908 = vadd.f32 %v810, %v900
        %v909 = vadd.f32 %v811, %v905
        %s910 = sadd.s32 %s229, 7
        %s911 = scalar_lea.vmem %s224, %s910
        %v912 = vld [vmem:[%s911] sm:$0xff]
        %v913 = vld [vmem:[%s911 + $0x8] sm:$0xff]
        %s914 = scalar_lea.vmem [#allocation2], 896
        %v915 = vld [vmem:[%s914] sm:$0xff]
        %v916 = vld [vmem:[%s914 + $0x8] sm:$0xff]
        %v917 = vld [vmem:[%s914 + $0x10] sm:$0xff]
        %v918 = vld [vmem:[%s914 + $0x18] sm:$0xff]
        %v919 = vld [vmem:[%s914 + $0x20] sm:$0xff]
        %v920 = vld [vmem:[%s914 + $0x28] sm:$0xff]
        %v921 = vld [vmem:[%s914 + $0x30] sm:$0xff]
        %v922 = vld [vmem:[%s914 + $0x38] sm:$0xff]
        %v923 = vld [vmem:[%s914 + $0x40] sm:$0xff]
        %v924 = vld [vmem:[%s914 + $0x48] sm:$0xff]
        %v925 = vld [vmem:[%s914 + $0x50] sm:$0xff]
        %v926 = vld [vmem:[%s914 + $0x58] sm:$0xff]
        %v927 = vld [vmem:[%s914 + $0x60] sm:$0xff]
        %v928 = vld [vmem:[%s914 + $0x68] sm:$0xff]
        %v929 = vld [vmem:[%s914 + $0x70] sm:$0xff]
        %v930 = vld [vmem:[%s914 + $0x78] sm:$0xff]
        %931 = vmatprep.subr.mxu0 0.0
        %932 = vmatpush1.msra.mxu0 %v915
        %933 = vmatprep.subr.mxu0 0.0
        %934 = vmatpush1.msra.mxu0 %v916
        %935 = vmatprep.subr.mxu0 0.0
        %936 = vmatpush1.msra.mxu0 %v917
        %937 = vmatprep.subr.mxu0 0.0
        %938 = vmatpush1.msra.mxu0 %v918
        %939 = vmatprep.subr.mxu0 0.0
        %940 = vmatpush1.msra.mxu0 %v919
        %941 = vmatprep.subr.mxu0 0.0
        %942 = vmatpush1.msra.mxu0 %v920
        %943 = vmatprep.subr.mxu0 0.0
        %944 = vmatpush1.msra.mxu0 %v921
        %945 = vmatprep.subr.mxu0 0.0
        %946 = vmatpush1.msra.mxu0 %v922
        %947 = vmatprep.subr.mxu0 0.0
        %948 = vmatpush1.msra.mxu0 %v923
        %949 = vmatprep.subr.mxu0 0.0
        %950 = vmatpush1.msra.mxu0 %v924
        %951 = vmatprep.subr.mxu0 0.0
        %952 = vmatpush1.msra.mxu0 %v925
        %953 = vmatprep.subr.mxu0 0.0
        %954 = vmatpush1.msra.mxu0 %v926
        %955 = vmatprep.subr.mxu0 0.0
        %956 = vmatpush1.msra.mxu0 %v927
        %957 = vmatprep.subr.mxu0 0.0
        %958 = vmatpush1.msra.mxu0 %v928
        %959 = vmatprep.subr.mxu0 0.0
        %960 = vmatpush1.msra.mxu0 %v929
        %961 = vmatprep.subr.mxu0 0.0
        %962 = vmatpush1.msra.mxu0 %v930
        %963 = vmatprep.subr.mxu0 0.0
        %964 = vmatpush1.msra.mxu0 0.0
        %965 = vmatprep.subr.mxu0 0.0
        %966 = vmatpush1.msra.mxu0 0.0
        %967 = vmatprep.subr.mxu0 0.0
        %968 = vmatpush1.msra.mxu0 0.0
        %969 = vmatprep.subr.mxu0 0.0
        %970 = vmatpush1.msra.mxu0 0.0
        %971 = vmatprep.subr.mxu0 0.0
        %972 = vmatpush1.msra.mxu0 0.0
        %973 = vmatprep.subr.mxu0 0.0
        %974 = vmatpush1.msra.mxu0 0.0
        %975 = vmatprep.subr.mxu0 0.0
        %976 = vmatpush1.msra.mxu0 0.0
        %977 = vmatprep.subr.mxu0 0.0
        %978 = vmatpush1.msra.mxu0 0.0
        %979 = vmatprep.subr.mxu0 0.0
        %980 = vmatpush1.msra.mxu0 0.0
        %981 = vmatprep.subr.mxu0 0.0
        %982 = vmatpush1.msra.mxu0 0.0
        %983 = vmatprep.subr.mxu0 0.0
        %984 = vmatpush1.msra.mxu0 0.0
        %985 = vmatprep.subr.mxu0 0.0
        %986 = vmatpush1.msra.mxu0 0.0
        %987 = vmatprep.subr.mxu0 0.0
        %988 = vmatpush1.msra.mxu0 0.0
        %989 = vmatprep.subr.mxu0 0.0
        %990 = vmatpush1.msra.mxu0 0.0
        %991 = vmatprep.subr.mxu0 0.0
        %992 = vmatpush1.msra.mxu0 0.0
        %993 = vmatprep.subr.mxu0 0.0
        %994 = vmatpush1.msra.mxu0 0.0
        %995 = vmatprep.mubr.f32.mxu0 0.0
        %996 = vmatmul.mubr.f32.gmra.mrb[0].mxu0 %v912
        %v997 = vpop.f32.mrb[0].mxu0
        %v998 = vadd.f32 0.0, %v997
        %v999 = vpop.f32.mrb[0].mxu0
        %1000 = vmatprep.mubr.f32.mxu0 0.0
        %1001 = vmatmul.mubr.f32.gmra.mrb[0].mxu0 %v913
        %v1002 = vpop.f32.mrb[0].mxu0
        %v1003 = vadd.f32 0.0, %v1002
        %v1004 = vpop.f32.mrb[0].mxu0
        %1005 = vdwg.mxu0
        %v1006 = vadd.f32 %v908, %v998
        %v1007 = vadd.f32 %v909, %v1003
        %s1008 = sadd.s32 %s229, 8
        %s1009 = scalar_lea.vmem %s224, %s1008
        %v1010 = vld [vmem:[%s1009] sm:$0xff]
        %v1011 = vld [vmem:[%s1009 + $0x8] sm:$0xff]
        %s1012 = scalar_lea.vmem [#allocation2], 1024
        %v1013 = vld [vmem:[%s1012] sm:$0xff]
        %v1014 = vld [vmem:[%s1012 + $0x8] sm:$0xff]
        %v1015 = vld [vmem:[%s1012 + $0x10] sm:$0xff]
        %v1016 = vld [vmem:[%s1012 + $0x18] sm:$0xff]
        %v1017 = vld [vmem:[%s1012 + $0x20] sm:$0xff]
        %v1018 = vld [vmem:[%s1012 + $0x28] sm:$0xff]
        %v1019 = vld [vmem:[%s1012 + $0x30] sm:$0xff]
        %v1020 = vld [vmem:[%s1012 + $0x38] sm:$0xff]
        %v1021 = vld [vmem:[%s1012 + $0x40] sm:$0xff]
        %v1022 = vld [vmem:[%s1012 + $0x48] sm:$0xff]
        %v1023 = vld [vmem:[%s1012 + $0x50] sm:$0xff]
        %v1024 = vld [vmem:[%s1012 + $0x58] sm:$0xff]
        %v1025 = vld [vmem:[%s1012 + $0x60] sm:$0xff]
        %v1026 = vld [vmem:[%s1012 + $0x68] sm:$0xff]
        %v1027 = vld [vmem:[%s1012 + $0x70] sm:$0xff]
        %v1028 = vld [vmem:[%s1012 + $0x78] sm:$0xff]
        %1029 = vmatprep.subr.mxu0 0.0
        %1030 = vmatpush1.msra.mxu0 %v1013
        %1031 = vmatprep.subr.mxu0 0.0
        %1032 = vmatpush1.msra.mxu0 %v1014
        %1033 = vmatprep.subr.mxu0 0.0
        %1034 = vmatpush1.msra.mxu0 %v1015
        %1035 = vmatprep.subr.mxu0 0.0
        %1036 = vmatpush1.msra.mxu0 %v1016
        %1037 = vmatprep.subr.mxu0 0.0
        %1038 = vmatpush1.msra.mxu0 %v1017
        %1039 = vmatprep.subr.mxu0 0.0
        %1040 = vmatpush1.msra.mxu0 %v1018
        %1041 = vmatprep.subr.mxu0 0.0
        %1042 = vmatpush1.msra.mxu0 %v1019
        %1043 = vmatprep.subr.mxu0 0.0
        %1044 = vmatpush1.msra.mxu0 %v1020
        %1045 = vmatprep.subr.mxu0 0.0
        %1046 = vmatpush1.msra.mxu0 %v1021
        %1047 = vmatprep.subr.mxu0 0.0
        %1048 = vmatpush1.msra.mxu0 %v1022
        %1049 = vmatprep.subr.mxu0 0.0
        %1050 = vmatpush1.msra.mxu0 %v1023
        %1051 = vmatprep.subr.mxu0 0.0
        %1052 = vmatpush1.msra.mxu0 %v1024
        %1053 = vmatprep.subr.mxu0 0.0
        %1054 = vmatpush1.msra.mxu0 %v1025
        %1055 = vmatprep.subr.mxu0 0.0
        %1056 = vmatpush1.msra.mxu0 %v1026
        %1057 = vmatprep.subr.mxu0 0.0
        %1058 = vmatpush1.msra.mxu0 %v1027
        %1059 = vmatprep.subr.mxu0 0.0
        %1060 = vmatpush1.msra.mxu0 %v1028
        %1061 = vmatprep.subr.mxu0 0.0
        %1062 = vmatpush1.msra.mxu0 0.0
        %1063 = vmatprep.subr.mxu0 0.0
        %1064 = vmatpush1.msra.mxu0 0.0
        %1065 = vmatprep.subr.mxu0 0.0
        %1066 = vmatpush1.msra.mxu0 0.0
        %1067 = vmatprep.subr.mxu0 0.0
        %1068 = vmatpush1.msra.mxu0 0.0
        %1069 = vmatprep.subr.mxu0 0.0
        %1070 = vmatpush1.msra.mxu0 0.0
        %1071 = vmatprep.subr.mxu0 0.0
        %1072 = vmatpush1.msra.mxu0 0.0
        %1073 = vmatprep.subr.mxu0 0.0
        %1074 = vmatpush1.msra.mxu0 0.0
        %1075 = vmatprep.subr.mxu0 0.0
        %1076 = vmatpush1.msra.mxu0 0.0
        %1077 = vmatprep.subr.mxu0 0.0
        %1078 = vmatpush1.msra.mxu0 0.0
        %1079 = vmatprep.subr.mxu0 0.0
        %1080 = vmatpush1.msra.mxu0 0.0
        %1081 = vmatprep.subr.mxu0 0.0
        %1082 = vmatpush1.msra.mxu0 0.0
        %1083 = vmatprep.subr.mxu0 0.0
        %1084 = vmatpush1.msra.mxu0 0.0
        %1085 = vmatprep.subr.mxu0 0.0
        %1086 = vmatpush1.msra.mxu0 0.0
        %1087 = vmatprep.subr.mxu0 0.0
        %1088 = vmatpush1.msra.mxu0 0.0
        %1089 = vmatprep.subr.mxu0 0.0
        %1090 = vmatpush1.msra.mxu0 0.0
        %1091 = vmatprep.subr.mxu0 0.0
        %1092 = vmatpush1.msra.mxu0 0.0
        %1093 = vmatprep.mubr.f32.mxu0 0.0
        %1094 = vmatmul.mubr.f32.gmra.mrb[0].mxu0 %v1010
        %v1095 = vpop.f32.mrb[0].mxu0
        %v1096 = vadd.f32 0.0, %v1095
        %v1097 = vpop.f32.mrb[0].mxu0
        %1098 = vmatprep.mubr.f32.mxu0 0.0
        %1099 = vmatmul.mubr.f32.gmra.mrb[0].mxu0 %v1011
        %v1100 = vpop.f32.mrb[0].mxu0
        %v1101 = vadd.f32 0.0, %v1100
        %v1102 = vpop.f32.mrb[0].mxu0
        %1103 = vdwg.mxu0
        %v1104 = vadd.f32 %v1006, %v1096
        %v1105 = vadd.f32 %v1007, %v1101
        %s1106 = sadd.s32 %s229, 9
        %s1107 = scalar_lea.vmem %s224, %s1106
        %v1108 = vld [vmem:[%s1107] sm:$0xff]
        %v1109 = vld [vmem:[%s1107 + $0x8] sm:$0xff]
        %s1110 = scalar_lea.vmem [#allocation2], 1152
        %v1111 = vld [vmem:[%s1110] sm:$0xff]
        %v1112 = vld [vmem:[%s1110 + $0x8] sm:$0xff]
        %v1113 = vld [vmem:[%s1110 + $0x10] sm:$0xff]
        %v1114 = vld [vmem:[%s1110 + $0x18] sm:$0xff]
        %v1115 = vld [vmem:[%s1110 + $0x20] sm:$0xff]
        %v1116 = vld [vmem:[%s1110 + $0x28] sm:$0xff]
        %v1117 = vld [vmem:[%s1110 + $0x30] sm:$0xff]
        %v1118 = vld [vmem:[%s1110 + $0x38] sm:$0xff]
        %v1119 = vld [vmem:[%s1110 + $0x40] sm:$0xff]
        %v1120 = vld [vmem:[%s1110 + $0x48] sm:$0xff]
        %v1121 = vld [vmem:[%s1110 + $0x50] sm:$0xff]
        %v1122 = vld [vmem:[%s1110 + $0x58] sm:$0xff]
        %v1123 = vld [vmem:[%s1110 + $0x60] sm:$0xff]
        %v1124 = vld [vmem:[%s1110 + $0x68] sm:$0xff]
        %v1125 = vld [vmem:[%s1110 + $0x70] sm:$0xff]
        %v1126 = vld [vmem:[%s1110 + $0x78] sm:$0xff]
        %1127 = vmatprep.subr.mxu0 0.0
        %1128 = vmatpush1.msra.mxu0 %v1111
        %1129 = vmatprep.subr.mxu0 0.0
        %1130 = vmatpush1.msra.mxu0 %v1112
        %1131 = vmatprep.subr.mxu0 0.0
        %1132 = vmatpush1.msra.mxu0 %v1113
        %1133 = vmatprep.subr.mxu0 0.0
        %1134 = vmatpush1.msra.mxu0 %v1114
        %1135 = vmatprep.subr.mxu0 0.0
        %1136 = vmatpush1.msra.mxu0 %v1115
        %1137 = vmatprep.subr.mxu0 0.0
        %1138 = vmatpush1.msra.mxu0 %v1116
        %1139 = vmatprep.subr.mxu0 0.0
        %1140 = vmatpush1.msra.mxu0 %v1117
        %1141 = vmatprep.subr.mxu0 0.0
        %1142 = vmatpush1.msra.mxu0 %v1118
        %1143 = vmatprep.subr.mxu0 0.0
        %1144 = vmatpush1.msra.mxu0 %v1119
        %1145 = vmatprep.subr.mxu0 0.0
        %1146 = vmatpush1.msra.mxu0 %v1120
        %1147 = vmatprep.subr.mxu0 0.0
        %1148 = vmatpush1.msra.mxu0 %v1121
        %1149 = vmatprep.subr.mxu0 0.0
        %1150 = vmatpush1.msra.mxu0 %v1122
        %1151 = vmatprep.subr.mxu0 0.0
        %1152 = vmatpush1.msra.mxu0 %v1123
        %1153 = vmatprep.subr.mxu0 0.0
        %1154 = vmatpush1.msra.mxu0 %v1124
        %1155 = vmatprep.subr.mxu0 0.0
        %1156 = vmatpush1.msra.mxu0 %v1125
        %1157 = vmatprep.subr.mxu0 0.0
        %1158 = vmatpush1.msra.mxu0 %v1126
        %1159 = vmatprep.subr.mxu0 0.0
        %1160 = vmatpush1.msra.mxu0 0.0
        %1161 = vmatprep.subr.mxu0 0.0
        %1162 = vmatpush1.msra.mxu0 0.0
        %1163 = vmatprep.subr.mxu0 0.0
        %1164 = vmatpush1.msra.mxu0 0.0
        %1165 = vmatprep.subr.mxu0 0.0
        %1166 = vmatpush1.msra.mxu0 0.0
        %1167 = vmatprep.subr.mxu0 0.0
        %1168 = vmatpush1.msra.mxu0 0.0
        %1169 = vmatprep.subr.mxu0 0.0
        %1170 = vmatpush1.msra.mxu0 0.0
        %1171 = vmatprep.subr.mxu0 0.0
        %1172 = vmatpush1.msra.mxu0 0.0
        %1173 = vmatprep.subr.mxu0 0.0
        %1174 = vmatpush1.msra.mxu0 0.0
        %1175 = vmatprep.subr.mxu0 0.0
        %1176 = vmatpush1.msra.mxu0 0.0
        %1177 = vmatprep.subr.mxu0 0.0
        %1178 = vmatpush1.msra.mxu0 0.0
        %1179 = vmatprep.subr.mxu0 0.0
        %1180 = vmatpush1.msra.mxu0 0.0
        %1181 = vmatprep.subr.mxu0 0.0
        %1182 = vmatpush1.msra.mxu0 0.0
        %1183 = vmatprep.subr.mxu0 0.0
        %1184 = vmatpush1.msra.mxu0 0.0
        %1185 = vmatprep.subr.mxu0 0.0
        %1186 = vmatpush1.msra.mxu0 0.0
        %1187 = vmatprep.subr.mxu0 0.0
        %1188 = vmatpush1.msra.mxu0 0.0
        %1189 = vmatprep.subr.mxu0 0.0
        %1190 = vmatpush1.msra.mxu0 0.0
        %1191 = vmatprep.mubr.f32.mxu0 0.0
        %1192 = vmatmul.mubr.f32.gmra.mrb[0].mxu0 %v1108
        %v1193 = vpop.f32.mrb[0].mxu0
        %v1194 = vadd.f32 0.0, %v1193
        %v1195 = vpop.f32.mrb[0].mxu0
        %1196 = vmatprep.mubr.f32.mxu0 0.0
        %1197 = vmatmul.mubr.f32.gmra.mrb[0].mxu0 %v1109
        %v1198 = vpop.f32.mrb[0].mxu0
        %v1199 = vadd.f32 0.0, %v1198
        %v1200 = vpop.f32.mrb[0].mxu0
        %1201 = vdwg.mxu0
        %v1202 = vadd.f32 %v1104, %v1194
        %v1203 = vadd.f32 %v1105, %v1199
        %s1204 = sadd.s32 %s229, 10
        %s1205 = scalar_lea.vmem %s224, %s1204
        %v1206 = vld [vmem:[%s1205] sm:$0xff]
        %v1207 = vld [vmem:[%s1205 + $0x8] sm:$0xff]
        %s1208 = scalar_lea.vmem [#allocation2], 1280
        %v1209 = vld [vmem:[%s1208] sm:$0xff]
        %v1210 = vld [vmem:[%s1208 + $0x8] sm:$0xff]
        %v1211 = vld [vmem:[%s1208 + $0x10] sm:$0xff]
        %v1212 = vld [vmem:[%s1208 + $0x18] sm:$0xff]
        %v1213 = vld [vmem:[%s1208 + $0x20] sm:$0xff]
        %v1214 = vld [vmem:[%s1208 + $0x28] sm:$0xff]
        %v1215 = vld [vmem:[%s1208 + $0x30] sm:$0xff]
        %v1216 = vld [vmem:[%s1208 + $0x38] sm:$0xff]
        %v1217 = vld [vmem:[%s1208 + $0x40] sm:$0xff]
        %v1218 = vld [vmem:[%s1208 + $0x48] sm:$0xff]
        %v1219 = vld [vmem:[%s1208 + $0x50] sm:$0xff]
        %v1220 = vld [vmem:[%s1208 + $0x58] sm:$0xff]
        %v1221 = vld [vmem:[%s1208 + $0x60] sm:$0xff]
        %v1222 = vld [vmem:[%s1208 + $0x68] sm:$0xff]
        %v1223 = vld [vmem:[%s1208 + $0x70] sm:$0xff]
        %v1224 = vld [vmem:[%s1208 + $0x78] sm:$0xff]
        %1225 = vmatprep.subr.mxu0 0.0
        %1226 = vmatpush1.msra.mxu0 %v1209
        %1227 = vmatprep.subr.mxu0 0.0
        %1228 = vmatpush1.msra.mxu0 %v1210
        %1229 = vmatprep.subr.mxu0 0.0
        %1230 = vmatpush1.msra.mxu0 %v1211
        %1231 = vmatprep.subr.mxu0 0.0
        %1232 = vmatpush1.msra.mxu0 %v1212
        %1233 = vmatprep.subr.mxu0 0.0
        %1234 = vmatpush1.msra.mxu0 %v1213
        %1235 = vmatprep.subr.mxu0 0.0
        %1236 = vmatpush1.msra.mxu0 %v1214
        %1237 = vmatprep.subr.mxu0 0.0
        %1238 = vmatpush1.msra.mxu0 %v1215
        %1239 = vmatprep.subr.mxu0 0.0
        %1240 = vmatpush1.msra.mxu0 %v1216
        %1241 = vmatprep.subr.mxu0 0.0
        %1242 = vmatpush1.msra.mxu0 %v1217
        %1243 = vmatprep.subr.mxu0 0.0
        %1244 = vmatpush1.msra.mxu0 %v1218
        %1245 = vmatprep.subr.mxu0 0.0
        %1246 = vmatpush1.msra.mxu0 %v1219
        %1247 = vmatprep.subr.mxu0 0.0
        %1248 = vmatpush1.msra.mxu0 %v1220
        %1249 = vmatprep.subr.mxu0 0.0
        %1250 = vmatpush1.msra.mxu0 %v1221
        %1251 = vmatprep.subr.mxu0 0.0
        %1252 = vmatpush1.msra.mxu0 %v1222
        %1253 = vmatprep.subr.mxu0 0.0
        %1254 = vmatpush1.msra.mxu0 %v1223
        %1255 = vmatprep.subr.mxu0 0.0
        %1256 = vmatpush1.msra.mxu0 %v1224
        %1257 = vmatprep.subr.mxu0 0.0
        %1258 = vmatpush1.msra.mxu0 0.0
        %1259 = vmatprep.subr.mxu0 0.0
        %1260 = vmatpush1.msra.mxu0 0.0
        %1261 = vmatprep.subr.mxu0 0.0
        %1262 = vmatpush1.msra.mxu0 0.0
        %1263 = vmatprep.subr.mxu0 0.0
        %1264 = vmatpush1.msra.mxu0 0.0
        %1265 = vmatprep.subr.mxu0 0.0
        %1266 = vmatpush1.msra.mxu0 0.0
        %1267 = vmatprep.subr.mxu0 0.0
        %1268 = vmatpush1.msra.mxu0 0.0
        %1269 = vmatprep.subr.mxu0 0.0
        %1270 = vmatpush1.msra.mxu0 0.0
        %1271 = vmatprep.subr.mxu0 0.0
        %1272 = vmatpush1.msra.mxu0 0.0
        %1273 = vmatprep.subr.mxu0 0.0
        %1274 = vmatpush1.msra.mxu0 0.0
        %1275 = vmatprep.subr.mxu0 0.0
        %1276 = vmatpush1.msra.mxu0 0.0
        %1277 = vmatprep.subr.mxu0 0.0
        %1278 = vmatpush1.msra.mxu0 0.0
        %1279 = vmatprep.subr.mxu0 0.0
        %1280 = vmatpush1.msra.mxu0 0.0
        %1281 = vmatprep.subr.mxu0 0.0
        %1282 = vmatpush1.msra.mxu0 0.0
        %1283 = vmatprep.subr.mxu0 0.0
        %1284 = vmatpush1.msra.mxu0 0.0
        %1285 = vmatprep.subr.mxu0 0.0
        %1286 = vmatpush1.msra.mxu0 0.0
        %1287 = vmatprep.subr.mxu0 0.0
        %1288 = vmatpush1.msra.mxu0 0.0
        %1289 = vmatprep.mubr.f32.mxu0 0.0
        %1290 = vmatmul.mubr.f32.gmra.mrb[0].mxu0 %v1206
        %v1291 = vpop.f32.mrb[0].mxu0
        %v1292 = vadd.f32 0.0, %v1291
        %v1293 = vpop.f32.mrb[0].mxu0
        %1294 = vmatprep.mubr.f32.mxu0 0.0
        %1295 = vmatmul.mubr.f32.gmra.mrb[0].mxu0 %v1207
        %v1296 = vpop.f32.mrb[0].mxu0
        %v1297 = vadd.f32 0.0, %v1296
        %v1298 = vpop.f32.mrb[0].mxu0
        %1299 = vdwg.mxu0
        %v1300 = vadd.f32 %v1202, %v1292
        %v1301 = vadd.f32 %v1203, %v1297
        %v1302 = vld [vmem:[%s227] sm:$0x1]
        %v1304 = vlaneseq
        %v1305 = vshrl.u32 %v1304, 7
        %v1306 = vsub.s32 0, %v1305
        %v1307 = vrot.slane %v1302, %v1306
        %v1309 = vadd.f32 %v1300, %v1307
        %v1310 = vadd.f32 %v1301, %v1307
        %1311 = vst [vmem:[%s219] sm:$0xff] %v1309
        %1312 = vst [vmem:[%s219 + $0x8] sm:$0xff] %v1310
        %s1313 = sand.u32 %s127, 1
        %s1314 = scalar_lea.sflag [#allocation4], %s1313
        %s1315 = sand.u32 %s127, 1
        %s1316 = smul.addr %s1315, 16
        %s1317 = scalar_lea.vmem [#allocation5], %s1316
        // Predicated region
        $region37: #{tpu_custom_call.1} parent=31 // pred_check
          %p1318 = pneg %p137
        $region38: #{tpu_custom_call.1} parent=31 // pred_check_branch
          %1320 = sbr.rel (%p1318) target = $region40
        $region39: #{tpu_custom_call.1} parent=31 // pred_region
          %s1321 = smul.u32 2, %s24
          %s1323 = ssub.s32 256, 256
          %1324 = vsyncadd %s1314, %s1323
          %s1325 = sadd.s32 %s25, %s1321
          %s1326 = smul.addr %s23, 2
          %s1327 = sadd.s32 %s1325, %s1326
          %s1328 = smul.addr %s1327, 128
          %s1329 = scalar_lea.hbm %s3, %s1328
          %s1330 = sshll.u32 %s1317, 4
          %s1331 = int_to_ptr.vmem [resolvable:$true] %s1330
          %1336 = dma.vmem_to_hbm [thread:$0]  %s1331, 256, %s1329, %s1314, 128, 128, 8
        $region40: #{tpu_custom_call.1} parent=31 // pred_fallthru
          _
      $region32: #{tpu_custom_call.1} parent=5 // pred_fallthru
        _
      %p1337 = scmp.le.s32.totalorder 2, %s13
      // Predicated region
      $region41: #{tpu_custom_call.1} parent=5 // pred_check
        %p1338 = pneg %p1337
      $region42: #{tpu_custom_call.1} parent=5 // pred_check_branch
        %1340 = sbr.rel (%p1338) target = $region44
      $region43: #{tpu_custom_call.1} parent=5 // pred_region
        %s1341 = ssub.s32 %s13, 2
        // Predicated region
        $region45: #{tpu_custom_call.1} parent=43 // pred_check
          %p1342 = pneg %p143
        $region46: #{tpu_custom_call.1} parent=43 // pred_check_branch
          %1344 = sbr.rel (%p1342) target = $region48
        $region47: #{tpu_custom_call.1} parent=43 // pred_region
          %s1345 = sand.u32 %s128, 1
          %s1346 = scalar_lea.sflag [#allocation4], %s1345
          %s1347 = sand.u32 %s128, 1
          %s1348 = smul.addr %s1347, 16
          %s1349 = scalar_lea.vmem [#allocation5], %s1348
          %1350 = dma.done %s1346, 256
        $region48: #{tpu_custom_call.1} parent=43 // pred_fallthru
          _
      $region44: #{tpu_custom_call.1} parent=5 // pred_fallthru
        _
    $region6: #{tpu_custom_call.1} parent=1 // loop_footer
      %s17 = sadd.s32 1, %s13
    $region7: #{tpu_custom_call.1} parent=1 // loop_footer_branch
      %12 = sbr.rel target = $region3
    $region8: #{tpu_custom_call.1} parent=1 // loop_exit
      _
    %1351 = vsyncpa [#allocation3], 1
    %s1352 = scalar_lea.sflag [#allocation3], 1
    %1353 = vsyncpa %s1352, 1
    %1354 = vsyncpa [#allocation4], 1
    %s1355 = scalar_lea.sflag [#allocation4], 1
    %1356 = vsyncpa %s1355, 1

</llo_original>
